<compile_context>
chip_gen: v5e
topology: v5e:2x2
jax: 0.10.0
libtpu: 0.0.40
codegen_flags: <defaults>
</compile_context>

<pallas_src>
import jax
import jax.numpy as jnp
import numpy as np
from jax.experimental import pallas as pl
from jax.experimental.pallas import tpu as pltpu

F_IN = 3          # real input feature dim
F_IN_PAD = 8      # tiny lane pad for layout safety; cost-identical after the reorder
H1, H2, H3 = 64, 128, 128
FC1, FC2 = 64, 2
FC2_PAD = 128     # lane-dense fc2 output (unmasked vst); first 2 cols are the logits


def _gnn_kernel(a_ref, dinv_ref, x_ref,
                w1_ref, b1_ref, w2_ref, b2_ref, w3_ref, b3_ref,
                fw1_ref, fb1_ref, fw2_ref, fb2_ref,
                out_ref):
    a = a_ref[0]          # [N, N] bf16, unnormalized A + I (0/1, exact in bf16)
    dinv = dinv_ref[0]    # [N, 1] f32, D^{-1/2}
    h = x_ref[0]          # [N, F_IN_PAD] f32 (zero-padded features)

    def aggregate(h_f32):
        # A_hat @ h == dinv * (A @ (dinv * h))  -- exact reassociation; the
        # symmetric normalization rides on the feature matrix, not on A.
        hs = (h_f32 * dinv).astype(jnp.bfloat16)
        agg = jnp.dot(a, hs, preferred_element_type=jnp.float32)
        return agg * dinv

    def gcn_agg_first(h_f32, w_ref, b_ref):
        # (A_hat @ h) @ W : cheaper when F_in < F_out (layers 1 and 2)
        agg = aggregate(h_f32)
        hw = jnp.dot(agg.astype(jnp.bfloat16), w_ref[...],
                     preferred_element_type=jnp.float32)
        return jnp.maximum(hw + b_ref[...], 0.0)          # GCNConv -> ReLU

    def gcn_xform_first(h_f32, w_ref, b_ref):
        # A_hat @ (h @ W) : layer 3 is 128 -> 128, either order is equal cost
        hw = jnp.dot(h_f32.astype(jnp.bfloat16), w_ref[...],
                     preferred_element_type=jnp.float32)
        return jnp.maximum(aggregate(hw) + b_ref[...], 0.0)

    h = gcn_agg_first(h, w1_ref, b1_ref)      # GCNConv(3, 64)   + ReLU (+Dropout=id)
    h = gcn_agg_first(h, w2_ref, b2_ref)      # GCNConv(64, 128) + ReLU (+Dropout=id)
    h = gcn_xform_first(h, w3_ref, b3_ref)    # GCNConv(128,128) + ReLU (+Dropout=id)

    # fc1 + ReLU
    h = jnp.maximum(
        jnp.dot(h.astype(jnp.bfloat16), fw1_ref[...],
                preferred_element_type=jnp.float32) + fb1_ref[...], 0.0)
    # fc2 (columns padded to a lane-dense 128; first FC2 are the real logits)
    out_ref[0] = (jnp.dot(h.astype(jnp.bfloat16), fw2_ref[...],
                          preferred_element_type=jnp.float32) + fb2_ref[...])


def build_adj_and_dinv(edge_index, num_nodes):
    """Raw (A + I) as exact 0/1 bf16 plus D^{-1/2} column vector (f32).

    Matches PyG GCNConv defaults (add_self_loops=True, normalize=True); the
    symmetric normalization itself is applied inside the kernel."""
    src, dst = edge_index[0], edge_index[1]
    a = jnp.zeros((num_nodes, num_nodes), jnp.float32)
    a = a.at[dst, src].set(1.0)                      # A[i, j] = 1 iff edge j -> i
    idx = jnp.arange(num_nodes)
    a = a.at[idx, idx].set(1.0)                      # self-loops
    deg = a.sum(axis=1)                              # in-degree incl. self-loop
    dinv = jax.lax.rsqrt(deg)
    return a.astype(jnp.bfloat16), dinv[:, None]


def init_params(key):
    ks = jax.random.split(key, 8)

    def glorot(k, fan_in, fan_out):
        s = np.sqrt(6.0 / (fan_in + fan_out)).astype(np.float32)
        return jax.random.uniform(k, (fan_in, fan_out), jnp.float32, -s, s)

    return {
        "w1": glorot(ks[0], F_IN, H1), "b1": jnp.zeros((1, H1), jnp.float32),
        "w2": glorot(ks[1], H1, H2),   "b2": jnp.zeros((1, H2), jnp.float32),
        "w3": glorot(ks[2], H2, H3),   "b3": jnp.zeros((1, H3), jnp.float32),
        "fw1": glorot(ks[3], H3, FC1),
        "fb1": jax.random.uniform(ks[4], (1, FC1), jnp.float32, -0.1, 0.1),
        "fw2": glorot(ks[5], FC1, FC2),
        "fb2": jax.random.uniform(ks[6], (1, FC2), jnp.float32, -0.1, 0.1),
    }


def prepare_params(params):
    """One-time packing (NOT per call): pad w1 rows to F_IN_PAD, pad fc2 to a
    lane-dense 128-wide output, cast matmul weights to bf16 (biases stay f32)."""
    return {
        "w1": jnp.pad(params["w1"], ((0, F_IN_PAD - F_IN), (0, 0))).astype(jnp.bfloat16),
        "b1": params["b1"],
        "w2": params["w2"].astype(jnp.bfloat16), "b2": params["b2"],
        "w3": params["w3"].astype(jnp.bfloat16), "b3": params["b3"],
        "fw1": params["fw1"].astype(jnp.bfloat16), "fb1": params["fb1"],
        "fw2": jnp.pad(params["fw2"], ((0, 0), (0, FC2_PAD - FC2))).astype(jnp.bfloat16),
        "fb2": jnp.pad(params["fb2"], ((0, 0), (0, FC2_PAD - FC2))),
    }


def _cost_estimate(batch, n):
    agg_flops = 2 * n * n * (F_IN_PAD + H1 + H3)        # the three A_hat matmuls
    xform_flops = 2 * n * (F_IN_PAD * H1 + H1 * H2 + H2 * H3 + H3 * FC1 + FC1 * FC2_PAD)
    param_bytes = 2 * (F_IN_PAD * H1 + H1 * H2 + H2 * H3 + H3 * FC1 + FC1 * FC2_PAD) \
        + 4 * (H1 + H2 + H3 + FC1 + FC2_PAD)
    io_bytes = batch * (2 * n * n + 4 * n + 4 * n * F_IN_PAD + 4 * n * FC2_PAD)
    return pl.CostEstimate(flops=batch * (agg_flops + xform_flops),
                           transcendentals=0,
                           bytes_accessed=io_bytes + param_bytes)


def gnn_forward_pallas(x, edge_index, packed):
    """Batched forward.

    x:          [B, N, F_IN]  f32 node features
    edge_index: [B, 2, E]     int32 COO edges (row 0 = src, row 1 = dst)
    packed:     output of prepare_params()
    returns     [B, N, FC2_PAD] f32 -- first FC2 columns are the logits
                (lane-dense padded output kept on purpose; slice downstream).
    """
    B, N, _ = x.shape
    a, dinv = jax.vmap(lambda ei: build_adj_and_dinv(ei, N))(edge_index)
    xp = jnp.pad(x, ((0, 0), (0, 0), (0, F_IN_PAD - F_IN)))

    per_graph = lambda b: (b, 0, 0)
    shared = lambda b: (0, 0)

    in_specs = [
        pl.BlockSpec((1, N, N), per_graph),              # A + I (bf16)
        pl.BlockSpec((1, N, 1), per_graph),              # D^{-1/2}
        pl.BlockSpec((1, N, F_IN_PAD), per_graph),       # node features
        pl.BlockSpec((F_IN_PAD, H1), shared),
        pl.BlockSpec((1, H1), shared),
        pl.BlockSpec((H1, H2), shared),
        pl.BlockSpec((1, H2), shared),
        pl.BlockSpec((H2, H3), shared),
        pl.BlockSpec((1, H3), shared),
        pl.BlockSpec((H3, FC1), shared),
        pl.BlockSpec((1, FC1), shared),
        pl.BlockSpec((FC1, FC2_PAD), shared),
        pl.BlockSpec((1, FC2_PAD), shared),
    ]

    return pl.pallas_call(
        _gnn_kernel,
        out_shape=jax.ShapeDtypeStruct((B, N, FC2_PAD), jnp.float32),
        grid=(B,),
        in_specs=in_specs,
        out_specs=pl.BlockSpec((1, N, FC2_PAD), per_graph),
        compiler_params=pltpu.CompilerParams(
            dimension_semantics=("parallel",),            # one graph per TC on v7x
            vmem_limit_bytes=64 * 1024 * 1024),
        cost_estimate=_cost_estimate(B, N),
    )(a, dinv, xp,
      packed["w1"], packed["b1"], packed["w2"], packed["b2"],
      packed["w3"], packed["b3"],
      packed["fw1"], packed["fb1"], packed["fw2"], packed["fb2"])


def gnn_forward_reference(x, edge_index, params):
    """Pure-JAX f32 reference matching PyG GCNConv eval-mode semantics."""
    def one(xg, eig):
        n = xg.shape[0]
        a = jnp.zeros((n, n), jnp.float32)
        a = a.at[eig[1], eig[0]].set(1.0)
        idx = jnp.arange(n)
        a = a.at[idx, idx].set(1.0)
        dinv = jax.lax.rsqrt(a.sum(axis=1))
        a_hat = a * dinv[:, None] * dinv[None, :]
        h = jnp.maximum(a_hat @ (xg @ params["w1"]) + params["b1"], 0.0)
        h = jnp.maximum(a_hat @ (h @ params["w2"]) + params["b2"], 0.0)
        h = jnp.maximum(a_hat @ (h @ params["w3"]) + params["b3"], 0.0)
        h = jnp.maximum(h @ params["fw1"] + params["fb1"], 0.0)
        return h @ params["fw2"] + params["fb2"]
    return jax.vmap(one)(x, edge_index)


if __name__ == "__main__":
    key = jax.random.PRNGKey(0)
    k_feat, k_param = jax.random.split(key)

    B, N = 2, 128        # N=128 fills the MXU rows on v5e (half a pass on v6e/v7x)
    x = jax.random.normal(k_feat, (B, N, F_IN), jnp.float32)

    # Batch of undirected ring-like graphs: graph b links i <-> (i + 1 + b) % N.
    i = np.arange(N)
    graphs = []
    for b in range(B):
        nbr = (i + 1 + b) % N
        src = np.concatenate([i, nbr])
        dst = np.concatenate([nbr, i])
        graphs.append(np.stack([src, dst]))
    edge_index = jnp.asarray(np.stack(graphs), jnp.int32)     # [B, 2, 2N]

    params = init_params(k_param)
    packed = prepare_params(params)      # one-time bf16 cast + lane-dense fc2 pad

    out_padded = jax.block_until_ready(gnn_forward_pallas(x, edge_index, packed))
    out = np.asarray(out_padded)[..., :FC2]                   # logits

    ref = np.asarray(gnn_forward_reference(x, edge_index, params))
    assert out.shape == (B, N, FC2)
    # bf16 MXU operands with f32 accumulation -> relaxed tolerance vs f32 reference
    np.testing.assert_allclose(out, ref, rtol=2e-2, atol=2e-2)

    print("KERNEL_OK")
</pallas_src>

<mosaic_0001>
module attributes {stable_mosaic.version = 11 : i64} {
  func.func @_gnn_kernel(%arg0: i32, %arg1: memref<1x128x128xbf16, #tpu.memory_space<vmem>>, %arg2: memref<1x128x1xf32, #tpu.memory_space<vmem>>, %arg3: memref<1x128x8xf32, #tpu.memory_space<vmem>>, %arg4: memref<8x64xbf16, #tpu.memory_space<vmem>>, %arg5: memref<1x64xf32, #tpu.memory_space<vmem>>, %arg6: memref<64x128xbf16, #tpu.memory_space<vmem>>, %arg7: memref<1x128xf32, #tpu.memory_space<vmem>>, %arg8: memref<128x128xbf16, #tpu.memory_space<vmem>>, %arg9: memref<1x128xf32, #tpu.memory_space<vmem>>, %arg10: memref<128x64xbf16, #tpu.memory_space<vmem>>, %arg11: memref<1x64xf32, #tpu.memory_space<vmem>>, %arg12: memref<64x128xbf16, #tpu.memory_space<vmem>>, %arg13: memref<1x128xf32, #tpu.memory_space<vmem>>, %arg14: memref<1x128x128xf32, #tpu.memory_space<vmem>>) attributes {dimension_semantics = [#tpu.dimension_semantics<parallel>], iteration_bounds = array<i64: 2>, scalar_prefetch = 0 : i64, scratch_operands = 0 : i64, tpu.core_type = #tpu.core_type<tc>, window_params = [{transform_indices = @transform_0, window_bounds = array<i64: 1, 128, 128>}, {transform_indices = @transform_1, window_bounds = array<i64: 1, 128, 1>}, {transform_indices = @transform_2, window_bounds = array<i64: 1, 128, 8>}, {pipeline_mode = #tpu.pipeline_mode<synchronous>, transform_indices = @transform_3, window_bounds = array<i64: 8, 64>}, {pipeline_mode = #tpu.pipeline_mode<synchronous>, transform_indices = @transform_4, window_bounds = array<i64: 1, 64>}, {pipeline_mode = #tpu.pipeline_mode<synchronous>, transform_indices = @transform_5, window_bounds = array<i64: 64, 128>}, {pipeline_mode = #tpu.pipeline_mode<synchronous>, transform_indices = @transform_6, window_bounds = array<i64: 1, 128>}, {pipeline_mode = #tpu.pipeline_mode<synchronous>, transform_indices = @transform_7, window_bounds = array<i64: 128, 128>}, {pipeline_mode = #tpu.pipeline_mode<synchronous>, transform_indices = @transform_8, window_bounds = array<i64: 1, 128>}, {pipeline_mode = #tpu.pipeline_mode<synchronous>, transform_indices = @transform_9, window_bounds = array<i64: 128, 64>}, {pipeline_mode = #tpu.pipeline_mode<synchronous>, transform_indices = @transform_10, window_bounds = array<i64: 1, 64>}, {pipeline_mode = #tpu.pipeline_mode<synchronous>, transform_indices = @transform_11, window_bounds = array<i64: 64, 128>}, {pipeline_mode = #tpu.pipeline_mode<synchronous>, transform_indices = @transform_12, window_bounds = array<i64: 1, 128>}, {transform_indices = @transform_13, window_bounds = array<i64: 1, 128, 128>}]} {
    %c0 = arith.constant 0 : index
    %c0_0 = arith.constant 0 : index
    %c0_1 = arith.constant 0 : index
    %0 = vector.load %arg1[%c0, %c0_0, %c0_1] : memref<1x128x128xbf16, #tpu.memory_space<vmem>>, vector<1x128x128xbf16>
    %1 = vector.shape_cast %0 : vector<1x128x128xbf16> to vector<128x128xbf16>
    %c0_2 = arith.constant 0 : index
    %c0_3 = arith.constant 0 : index
    %c0_4 = arith.constant 0 : index
    %2 = vector.load %arg2[%c0_2, %c0_3, %c0_4] : memref<1x128x1xf32, #tpu.memory_space<vmem>>, vector<1x128x1xf32>
    %3 = vector.shape_cast %2 : vector<1x128x1xf32> to vector<128x1xf32>
    %c0_5 = arith.constant 0 : index
    %c0_6 = arith.constant 0 : index
    %c0_7 = arith.constant 0 : index
    %4 = vector.load %arg3[%c0_5, %c0_6, %c0_7] : memref<1x128x8xf32, #tpu.memory_space<vmem>>, vector<1x128x8xf32>
    %5 = vector.shape_cast %4 : vector<1x128x8xf32> to vector<128x8xf32>
    %6 = vector.broadcast %3 : vector<128x1xf32> to vector<128x8xf32>
    %7 = arith.mulf %5, %6 : vector<128x8xf32>
    %8 = arith.truncf %7 : vector<128x8xf32> to vector<128x8xbf16>
    %cst = arith.constant dense<0.000000e+00> : vector<128x8xf32>
    %9 = tpu.matmul %1, %8, %cst {dimension_numbers = #tpu.dot_dimension_numbers<[1], [0], [0], [1], [0, 0, 1, 1], [], []>} : vector<128x128xbf16>, vector<128x8xbf16>, vector<128x8xf32> -> vector<128x8xf32>
    %10 = vector.broadcast %3 : vector<128x1xf32> to vector<128x8xf32>
    %11 = arith.mulf %9, %10 : vector<128x8xf32>
    %12 = arith.truncf %11 : vector<128x8xf32> to vector<128x8xbf16>
    %c0_8 = arith.constant 0 : index
    %c0_9 = arith.constant 0 : index
    %13 = vector.load %arg4[%c0_8, %c0_9] : memref<8x64xbf16, #tpu.memory_space<vmem>>, vector<8x64xbf16>
    %cst_10 = arith.constant dense<0.000000e+00> : vector<128x64xf32>
    %14 = tpu.matmul %12, %13, %cst_10 {dimension_numbers = #tpu.dot_dimension_numbers<[1], [0], [0], [1], [0, 0, 1, 1], [], []>} : vector<128x8xbf16>, vector<8x64xbf16>, vector<128x64xf32> -> vector<128x64xf32>
    %c0_11 = arith.constant 0 : index
    %c0_12 = arith.constant 0 : index
    %15 = vector.load %arg5[%c0_11, %c0_12] : memref<1x64xf32, #tpu.memory_space<vmem>>, vector<1x64xf32>
    %16 = vector.broadcast %15 : vector<1x64xf32> to vector<128x64xf32>
    %17 = arith.addf %14, %16 : vector<128x64xf32>
    %cst_13 = arith.constant 0.000000e+00 : f32
    %18 = vector.broadcast %cst_13 : f32 to vector<128x64xf32>
    %19 = arith.maximumf %17, %18 : vector<128x64xf32>
    %20 = vector.broadcast %3 : vector<128x1xf32> to vector<128x64xf32>
    %21 = arith.mulf %19, %20 : vector<128x64xf32>
    %22 = arith.truncf %21 : vector<128x64xf32> to vector<128x64xbf16>
    %cst_14 = arith.constant dense<0.000000e+00> : vector<128x64xf32>
    %23 = tpu.matmul %1, %22, %cst_14 {dimension_numbers = #tpu.dot_dimension_numbers<[1], [0], [0], [1], [0, 0, 1, 1], [], []>} : vector<128x128xbf16>, vector<128x64xbf16>, vector<128x64xf32> -> vector<128x64xf32>
    %24 = vector.broadcast %3 : vector<128x1xf32> to vector<128x64xf32>
    %25 = arith.mulf %23, %24 : vector<128x64xf32>
    %26 = arith.truncf %25 : vector<128x64xf32> to vector<128x64xbf16>
    %c0_15 = arith.constant 0 : index
    %c0_16 = arith.constant 0 : index
    %27 = vector.load %arg6[%c0_15, %c0_16] : memref<64x128xbf16, #tpu.memory_space<vmem>>, vector<64x128xbf16>
    %cst_17 = arith.constant dense<0.000000e+00> : vector<128x128xf32>
    %28 = tpu.matmul %26, %27, %cst_17 {dimension_numbers = #tpu.dot_dimension_numbers<[1], [0], [0], [1], [0, 0, 1, 1], [], []>} : vector<128x64xbf16>, vector<64x128xbf16>, vector<128x128xf32> -> vector<128x128xf32>
    %c0_18 = arith.constant 0 : index
    %c0_19 = arith.constant 0 : index
    %29 = vector.load %arg7[%c0_18, %c0_19] : memref<1x128xf32, #tpu.memory_space<vmem>>, vector<1x128xf32>
    %30 = vector.broadcast %29 : vector<1x128xf32> to vector<128x128xf32>
    %31 = arith.addf %28, %30 : vector<128x128xf32>
    %cst_20 = arith.constant 0.000000e+00 : f32
    %32 = vector.broadcast %cst_20 : f32 to vector<128x128xf32>
    %33 = arith.maximumf %31, %32 : vector<128x128xf32>
    %34 = arith.truncf %33 : vector<128x128xf32> to vector<128x128xbf16>
    %c0_21 = arith.constant 0 : index
    %c0_22 = arith.constant 0 : index
    %35 = vector.load %arg8[%c0_21, %c0_22] : memref<128x128xbf16, #tpu.memory_space<vmem>>, vector<128x128xbf16>
    %cst_23 = arith.constant dense<0.000000e+00> : vector<128x128xf32>
    %36 = tpu.matmul %34, %35, %cst_23 {dimension_numbers = #tpu.dot_dimension_numbers<[1], [0], [0], [1], [0, 0, 1, 1], [], []>} : vector<128x128xbf16>, vector<128x128xbf16>, vector<128x128xf32> -> vector<128x128xf32>
    %37 = vector.broadcast %3 : vector<128x1xf32> to vector<128x128xf32>
    %38 = arith.mulf %36, %37 : vector<128x128xf32>
    %39 = arith.truncf %38 : vector<128x128xf32> to vector<128x128xbf16>
    %cst_24 = arith.constant dense<0.000000e+00> : vector<128x128xf32>
    %40 = tpu.matmul %1, %39, %cst_24 {dimension_numbers = #tpu.dot_dimension_numbers<[1], [0], [0], [1], [0, 0, 1, 1], [], []>} : vector<128x128xbf16>, vector<128x128xbf16>, vector<128x128xf32> -> vector<128x128xf32>
    %41 = vector.broadcast %3 : vector<128x1xf32> to vector<128x128xf32>
    %42 = arith.mulf %40, %41 : vector<128x128xf32>
    %c0_25 = arith.constant 0 : index
    %c0_26 = arith.constant 0 : index
    %43 = vector.load %arg9[%c0_25, %c0_26] : memref<1x128xf32, #tpu.memory_space<vmem>>, vector<1x128xf32>
    %44 = vector.broadcast %43 : vector<1x128xf32> to vector<128x128xf32>
    %45 = arith.addf %42, %44 : vector<128x128xf32>
    %cst_27 = arith.constant 0.000000e+00 : f32
    %46 = vector.broadcast %cst_27 : f32 to vector<128x128xf32>
    %47 = arith.maximumf %45, %46 : vector<128x128xf32>
    %48 = arith.truncf %47 : vector<128x128xf32> to vector<128x128xbf16>
    %c0_28 = arith.constant 0 : index
    %c0_29 = arith.constant 0 : index
    %49 = vector.load %arg10[%c0_28, %c0_29] : memref<128x64xbf16, #tpu.memory_space<vmem>>, vector<128x64xbf16>
    %cst_30 = arith.constant dense<0.000000e+00> : vector<128x64xf32>
    %50 = tpu.matmul %48, %49, %cst_30 {dimension_numbers = #tpu.dot_dimension_numbers<[1], [0], [0], [1], [0, 0, 1, 1], [], []>} : vector<128x128xbf16>, vector<128x64xbf16>, vector<128x64xf32> -> vector<128x64xf32>
    %c0_31 = arith.constant 0 : index
    %c0_32 = arith.constant 0 : index
    %51 = vector.load %arg11[%c0_31, %c0_32] : memref<1x64xf32, #tpu.memory_space<vmem>>, vector<1x64xf32>
    %52 = vector.broadcast %51 : vector<1x64xf32> to vector<128x64xf32>
    %53 = arith.addf %50, %52 : vector<128x64xf32>
    %cst_33 = arith.constant 0.000000e+00 : f32
    %54 = vector.broadcast %cst_33 : f32 to vector<128x64xf32>
    %55 = arith.maximumf %53, %54 : vector<128x64xf32>
    %56 = arith.truncf %55 : vector<128x64xf32> to vector<128x64xbf16>
    %c0_34 = arith.constant 0 : index
    %c0_35 = arith.constant 0 : index
    %57 = vector.load %arg12[%c0_34, %c0_35] : memref<64x128xbf16, #tpu.memory_space<vmem>>, vector<64x128xbf16>
    %cst_36 = arith.constant dense<0.000000e+00> : vector<128x128xf32>
    %58 = tpu.matmul %56, %57, %cst_36 {dimension_numbers = #tpu.dot_dimension_numbers<[1], [0], [0], [1], [0, 0, 1, 1], [], []>} : vector<128x64xbf16>, vector<64x128xbf16>, vector<128x128xf32> -> vector<128x128xf32>
    %c0_37 = arith.constant 0 : index
    %c0_38 = arith.constant 0 : index
    %59 = vector.load %arg13[%c0_37, %c0_38] : memref<1x128xf32, #tpu.memory_space<vmem>>, vector<1x128xf32>
    %60 = vector.broadcast %59 : vector<1x128xf32> to vector<128x128xf32>
    %61 = arith.addf %58, %60 : vector<128x128xf32>
    %c0_39 = arith.constant 0 : index
    %c0_40 = arith.constant 0 : index
    %c0_41 = arith.constant 0 : index
    %62 = vector.load %arg14[%c0_39, %c0_40, %c0_41] : memref<1x128x128xf32, #tpu.memory_space<vmem>>, vector<1x128x128xf32>
    %63 = vector.shape_cast %62 : vector<1x128x128xf32> to vector<128x128xf32>
    %64 = vector.shape_cast %61 : vector<128x128xf32> to vector<1x128x128xf32>
    tpu.vector_store %arg14[%c0_39, %c0_40, %c0_41], %64 {strides = array<i32>} : memref<1x128x128xf32, #tpu.memory_space<vmem>>, vector<1x128x128xf32>,
    return
  }
  func.func @transform_0(%arg0: i32) -> (i32, i32, i32) {
    %c0_i32 = arith.constant 0 : i32
    %c0_i32_0 = arith.constant 0 : i32
    %c0_i32_1 = arith.constant 0 : i32
    return %arg0, %c0_i32, %c0_i32_0 : i32, i32, i32
  }
  func.func @transform_1(%arg0: i32) -> (i32, i32, i32) {
    %c0_i32 = arith.constant 0 : i32
    %c0_i32_0 = arith.constant 0 : i32
    %c0_i32_1 = arith.constant 0 : i32
    return %arg0, %c0_i32, %c0_i32_0 : i32, i32, i32
  }
  func.func @transform_2(%arg0: i32) -> (i32, i32, i32) {
    %c0_i32 = arith.constant 0 : i32
    %c0_i32_0 = arith.constant 0 : i32
    %c0_i32_1 = arith.constant 0 : i32
    return %arg0, %c0_i32, %c0_i32_0 : i32, i32, i32
  }
  func.func @transform_3(%arg0: i32) -> (i32, i32) {
    %c0_i32 = arith.constant 0 : i32
    %c0_i32_0 = arith.constant 0 : i32
    %c0_i32_1 = arith.constant 0 : i32
    return %c0_i32, %c0_i32_0 : i32, i32
  }
  func.func @transform_4(%arg0: i32) -> (i32, i32) {
    %c0_i32 = arith.constant 0 : i32
    %c0_i32_0 = arith.constant 0 : i32
    %c0_i32_1 = arith.constant 0 : i32
    return %c0_i32, %c0_i32_0 : i32, i32
  }
  func.func @transform_5(%arg0: i32) -> (i32, i32) {
    %c0_i32 = arith.constant 0 : i32
    %c0_i32_0 = arith.constant 0 : i32
    %c0_i32_1 = arith.constant 0 : i32
    return %c0_i32, %c0_i32_0 : i32, i32
  }
  func.func @transform_6(%arg0: i32) -> (i32, i32) {
    %c0_i32 = arith.constant 0 : i32
    %c0_i32_0 = arith.constant 0 : i32
    %c0_i32_1 = arith.constant 0 : i32
    return %c0_i32, %c0_i32_0 : i32, i32
  }
  func.func @transform_7(%arg0: i32) -> (i32, i32) {
    %c0_i32 = arith.constant 0 : i32
    %c0_i32_0 = arith.constant 0 : i32
    %c0_i32_1 = arith.constant 0 : i32
    return %c0_i32, %c0_i32_0 : i32, i32
  }
  func.func @transform_8(%arg0: i32) -> (i32, i32) {
    %c0_i32 = arith.constant 0 : i32
    %c0_i32_0 = arith.constant 0 : i32
    %c0_i32_1 = arith.constant 0 : i32
    return %c0_i32, %c0_i32_0 : i32, i32
  }
  func.func @transform_9(%arg0: i32) -> (i32, i32) {
    %c0_i32 = arith.constant 0 : i32
    %c0_i32_0 = arith.constant 0 : i32
    %c0_i32_1 = arith.constant 0 : i32
    return %c0_i32, %c0_i32_0 : i32, i32
  }
  func.func @transform_10(%arg0: i32) -> (i32, i32) {
    %c0_i32 = arith.constant 0 : i32
    %c0_i32_0 = arith.constant 0 : i32
    %c0_i32_1 = arith.constant 0 : i32
    return %c0_i32, %c0_i32_0 : i32, i32
  }
  func.func @transform_11(%arg0: i32) -> (i32, i32) {
    %c0_i32 = arith.constant 0 : i32
    %c0_i32_0 = arith.constant 0 : i32
    %c0_i32_1 = arith.constant 0 : i32
    return %c0_i32, %c0_i32_0 : i32, i32
  }
  func.func @transform_12(%arg0: i32) -> (i32, i32) {
    %c0_i32 = arith.constant 0 : i32
    %c0_i32_0 = arith.constant 0 : i32
    %c0_i32_1 = arith.constant 0 : i32
    return %c0_i32, %c0_i32_0 : i32, i32
  }
  func.func @transform_13(%arg0: i32) -> (i32, i32, i32) {
    %c0_i32 = arith.constant 0 : i32
    %c0_i32_0 = arith.constant 0 : i32
    %c0_i32_1 = arith.constant 0 : i32
    return %arg0, %c0_i32, %c0_i32_0 : i32, i32, i32
  }
}

</mosaic_0001>

<llo_original>
// kernel: tpu_custom_call.1
$region0: #{tpu_custom_call.1}
  #allocation0 [shape = 'u32[]', space=smem, size = 0x4, offset = 0x4, fixed_abs, tag = 'smem constant byte address 0x4 - core index']
  #allocation1 [shape = 'u32[72,128]{1,0:T(1,128)}', space=vmem, size = 0x9000, scoped, tag = 'internal scratch']
  %s0 = inlined_call_operand.vmem [shape: bf16[2,128,128], index: 0, kind: input, shape index: {}]
  %s1 = inlined_call_operand.vmem [shape: f32[2,128,1], index: 1, kind: input, shape index: {}]
  %s2 = inlined_call_operand.vmem [shape: f32[2,128,8], index: 2, kind: input, shape index: {}]
  %s3 = inlined_call_operand.vmem [shape: bf16[8,64], index: 3, kind: input, shape index: {}]
  %s4 = inlined_call_operand.vmem [shape: f32[1,64], index: 4, kind: input, shape index: {}]
  %s5 = inlined_call_operand.vmem [shape: bf16[64,128], index: 5, kind: input, shape index: {}]
  %s6 = inlined_call_operand.vmem [shape: f32[1,128], index: 6, kind: input, shape index: {}]
  %s7 = inlined_call_operand.vmem [shape: bf16[128,128], index: 7, kind: input, shape index: {}]
  %s8 = inlined_call_operand.vmem [shape: f32[1,128], index: 8, kind: input, shape index: {}]
  %s9 = inlined_call_operand.vmem [shape: bf16[128,64], index: 9, kind: input, shape index: {}]
  %s10 = inlined_call_operand.vmem [shape: f32[1,64], index: 10, kind: input, shape index: {}]
  %s11 = inlined_call_operand.vmem [shape: bf16[64,128], index: 11, kind: input, shape index: {}]
  %s12 = inlined_call_operand.vmem [shape: f32[1,128], index: 12, kind: input, shape index: {}]
  %s13 = inlined_call_operand.hbm [shape: f32[2,128,128], index: 13, kind: output, shape index: {}]
  %s14 = sld [smem:[#allocation0]]
  $region85: #{tpu_custom_call.1} parent=0
    _
  %s16 = ssub.s32 1, %s14
  %s17 = scalar_select 0, %s16, %s14
  $region1: #{tpu_custom_call.1} parent=0
    #allocation2 [shape = 'u8[131072]{0}', space=vmem, size = 0x20000, scoped, tag = 'output window, operand 0']
    #allocation3 [shape = 's32[2]{0}', space=sflag, size = 0x8, scoped, tag = 'scoped memory for tpu_custom_call.1']
    %18 = vsyncpa [#allocation3], 0
    %s19 = scalar_lea.sflag [#allocation3], 1
    %20 = vsyncpa %s19, 0
    loop: start=0, step=1, limit=4
    $region2: #{tpu_custom_call.1} parent=1 // loop_pre_header
      _
    $region3: #{tpu_custom_call.1} parent=1 // loop_header
      %s22 = sphi 0, %s26
      %p23 = scmp.ge.s32.totalorder %s22, 4
      %s32 = sphi 0, %s34
      %s35 = sphi 0, %s32
      %s36 = sphi 0, %s35
      %s52 = sphi 0, %s36
      %s58 = sphi 0, %s60
      %s61 = sphi 0, %s58
      %s62 = sphi 0, %s61
      %s78 = sphi 0, %s62
      %s84 = sphi 0, %s86
      %s87 = sphi 0, %s84
      %s88 = sphi 0, %s87
      %s104 = sphi 0, %s88
      %s108 = sphi 0, %s108
      %s110 = sphi 0, %s108
      %s111 = sphi 0, %s110
      %s125 = sphi 0, %s111
      %s129 = sphi 0, %s129
      %s131 = sphi 0, %s129
      %s132 = sphi 0, %s131
      %s146 = sphi 0, %s132
      %s150 = sphi 0, %s150
      %s152 = sphi 0, %s150
      %s153 = sphi 0, %s152
      %s167 = sphi 0, %s153
      %s171 = sphi 0, %s171
      %s173 = sphi 0, %s171
      %s174 = sphi 0, %s173
      %s188 = sphi 0, %s174
      %s192 = sphi 0, %s192
      %s194 = sphi 0, %s192
      %s195 = sphi 0, %s194
      %s209 = sphi 0, %s195
      %s213 = sphi 0, %s213
      %s215 = sphi 0, %s213
      %s216 = sphi 0, %s215
      %s230 = sphi 0, %s216
      %s234 = sphi 0, %s234
      %s236 = sphi 0, %s234
      %s237 = sphi 0, %s236
      %s251 = sphi 0, %s237
      %s255 = sphi 0, %s255
      %s257 = sphi 0, %s255
      %s258 = sphi 0, %s257
      %s272 = sphi 0, %s258
      %s276 = sphi 0, %s276
      %s278 = sphi 0, %s276
      %s279 = sphi 0, %s278
      %s293 = sphi 0, %s279
      %s297 = sphi 0, %s297
      %s299 = sphi 0, %s297
      %s300 = sphi 0, %s299
      %s314 = sphi 0, %s300
      %s320 = sphi 0, %s322
      %s323 = sphi 0, %s320
      %s324 = sphi 0, %s323
      %s340 = sphi 0, %s324
    $region4: #{tpu_custom_call.1} parent=1 // loop_header_branch
      %25 = sbr.rel (%p23) target = $region8
    $region5: #{tpu_custom_call.1} parent=1 // loop_body
      %s27 = ssub.s32 %s22, 1
      %s28 = ssub.s32 %s22, 2
      %s29 = sadd.s32 %s22, 1
      %s30 = ssub.s32 %s22, %s29
      %p31 = scmp.eq.s32.totalorder %s30, 0
      %s33 = sadd.s32 %s32, 1
      %s34 = scalar_select %p31, %s32, %s33
      %p37 = pneg %p31
      %p38 = scmp.eq.s32.totalorder %s22, 1
      %p39 = por %p37, %p38
      %p40 = scmp.ne.s32.totalorder %s32, %s35
      %p41 = scmp.eq.s32.totalorder %s22, 0
      %p42 = por %p40, %p41
      %p43 = scmp.ne.s32.totalorder %s32, %s35
      %p44 = scmp.eq.s32.totalorder %s27, 1
      %p45 = por %p43, %p44
      %p46 = scmp.ne.s32.totalorder %s35, %s36
      %p47 = scmp.eq.s32.totalorder %s27, 0
      %p48 = por %p46, %p47
      %p49 = scmp.ne.s32.totalorder %s35, %s36
      %p50 = scmp.eq.s32.totalorder %s28, 1
      %p51 = por %p49, %p50
      %p53 = scmp.ne.s32.totalorder %s36, %s52
      %p54 = scmp.eq.s32.totalorder %s28, 0
      %p55 = por %p53, %p54
      %s56 = ssub.s32 %s22, %s29
      %p57 = scmp.eq.s32.totalorder %s56, 0
      %s59 = sadd.s32 %s58, 1
      %s60 = scalar_select %p57, %s58, %s59
      %p63 = pneg %p57
      %p64 = scmp.eq.s32.totalorder %s22, 1
      %p65 = por %p63, %p64
      %p66 = scmp.ne.s32.totalorder %s58, %s61
      %p67 = scmp.eq.s32.totalorder %s22, 0
      %p68 = por %p66, %p67
      %p69 = scmp.ne.s32.totalorder %s58, %s61
      %p70 = scmp.eq.s32.totalorder %s27, 1
      %p71 = por %p69, %p70
      %p72 = scmp.ne.s32.totalorder %s61, %s62
      %p73 = scmp.eq.s32.totalorder %s27, 0
      %p74 = por %p72, %p73
      %p75 = scmp.ne.s32.totalorder %s61, %s62
      %p76 = scmp.eq.s32.totalorder %s28, 1
      %p77 = por %p75, %p76
      %p79 = scmp.ne.s32.totalorder %s62, %s78
      %p80 = scmp.eq.s32.totalorder %s28, 0
      %p81 = por %p79, %p80
      %s82 = ssub.s32 %s22, %s29
      %p83 = scmp.eq.s32.totalorder %s82, 0
      %s85 = sadd.s32 %s84, 1
      %s86 = scalar_select %p83, %s84, %s85
      %p89 = pneg %p83
      %p90 = scmp.eq.s32.totalorder %s22, 1
      %p91 = por %p89, %p90
      %p92 = scmp.ne.s32.totalorder %s84, %s87
      %p93 = scmp.eq.s32.totalorder %s22, 0
      %p94 = por %p92, %p93
      %p95 = scmp.ne.s32.totalorder %s84, %s87
      %p96 = scmp.eq.s32.totalorder %s27, 1
      %p97 = por %p95, %p96
      %p98 = scmp.ne.s32.totalorder %s87, %s88
      %p99 = scmp.eq.s32.totalorder %s27, 0
      %p100 = por %p98, %p99
      %p101 = scmp.ne.s32.totalorder %s87, %s88
      %p102 = scmp.eq.s32.totalorder %s28, 1
      %p103 = por %p101, %p102
      %p105 = scmp.ne.s32.totalorder %s88, %s104
      %p106 = scmp.eq.s32.totalorder %s28, 0
      %p107 = por %p105, %p106
      %s109 = sadd.s32 %s108, 1
      %p112 = scmp.eq.s32.totalorder %s22, 1
      %p113 = scmp.ne.s32.totalorder %s108, %s110
      %p114 = scmp.eq.s32.totalorder %s22, 0
      %p115 = por %p113, %p114
      %p116 = scmp.ne.s32.totalorder %s108, %s110
      %p117 = scmp.eq.s32.totalorder %s27, 1
      %p118 = por %p116, %p117
      %p119 = scmp.ne.s32.totalorder %s110, %s111
      %p120 = scmp.eq.s32.totalorder %s27, 0
      %p121 = por %p119, %p120
      %p122 = scmp.ne.s32.totalorder %s110, %s111
      %p123 = scmp.eq.s32.totalorder %s28, 1
      %p124 = por %p122, %p123
      %p126 = scmp.ne.s32.totalorder %s111, %s125
      %p127 = scmp.eq.s32.totalorder %s28, 0
      %p128 = por %p126, %p127
      %s130 = sadd.s32 %s129, 1
      %p133 = scmp.eq.s32.totalorder %s22, 1
      %p134 = scmp.ne.s32.totalorder %s129, %s131
      %p135 = scmp.eq.s32.totalorder %s22, 0
      %p136 = por %p134, %p135
      %p137 = scmp.ne.s32.totalorder %s129, %s131
      %p138 = scmp.eq.s32.totalorder %s27, 1
      %p139 = por %p137, %p138
      %p140 = scmp.ne.s32.totalorder %s131, %s132
      %p141 = scmp.eq.s32.totalorder %s27, 0
      %p142 = por %p140, %p141
      %p143 = scmp.ne.s32.totalorder %s131, %s132
      %p144 = scmp.eq.s32.totalorder %s28, 1
      %p145 = por %p143, %p144
      %p147 = scmp.ne.s32.totalorder %s132, %s146
      %p148 = scmp.eq.s32.totalorder %s28, 0
      %p149 = por %p147, %p148
      %s151 = sadd.s32 %s150, 1
      %p154 = scmp.eq.s32.totalorder %s22, 1
      %p155 = scmp.ne.s32.totalorder %s150, %s152
      %p156 = scmp.eq.s32.totalorder %s22, 0
      %p157 = por %p155, %p156
      %p158 = scmp.ne.s32.totalorder %s150, %s152
      %p159 = scmp.eq.s32.totalorder %s27, 1
      %p160 = por %p158, %p159
      %p161 = scmp.ne.s32.totalorder %s152, %s153
      %p162 = scmp.eq.s32.totalorder %s27, 0
      %p163 = por %p161, %p162
      %p164 = scmp.ne.s32.totalorder %s152, %s153
      %p165 = scmp.eq.s32.totalorder %s28, 1
      %p166 = por %p164, %p165
      %p168 = scmp.ne.s32.totalorder %s153, %s167
      %p169 = scmp.eq.s32.totalorder %s28, 0
      %p170 = por %p168, %p169
      %s172 = sadd.s32 %s171, 1
      %p175 = scmp.eq.s32.totalorder %s22, 1
      %p176 = scmp.ne.s32.totalorder %s171, %s173
      %p177 = scmp.eq.s32.totalorder %s22, 0
      %p178 = por %p176, %p177
      %p179 = scmp.ne.s32.totalorder %s171, %s173
      %p180 = scmp.eq.s32.totalorder %s27, 1
      %p181 = por %p179, %p180
      %p182 = scmp.ne.s32.totalorder %s173, %s174
      %p183 = scmp.eq.s32.totalorder %s27, 0
      %p184 = por %p182, %p183
      %p185 = scmp.ne.s32.totalorder %s173, %s174
      %p186 = scmp.eq.s32.totalorder %s28, 1
      %p187 = por %p185, %p186
      %p189 = scmp.ne.s32.totalorder %s174, %s188
      %p190 = scmp.eq.s32.totalorder %s28, 0
      %p191 = por %p189, %p190
      %s193 = sadd.s32 %s192, 1
      %p196 = scmp.eq.s32.totalorder %s22, 1
      %p197 = scmp.ne.s32.totalorder %s192, %s194
      %p198 = scmp.eq.s32.totalorder %s22, 0
      %p199 = por %p197, %p198
      %p200 = scmp.ne.s32.totalorder %s192, %s194
      %p201 = scmp.eq.s32.totalorder %s27, 1
      %p202 = por %p200, %p201
      %p203 = scmp.ne.s32.totalorder %s194, %s195
      %p204 = scmp.eq.s32.totalorder %s27, 0
      %p205 = por %p203, %p204
      %p206 = scmp.ne.s32.totalorder %s194, %s195
      %p207 = scmp.eq.s32.totalorder %s28, 1
      %p208 = por %p206, %p207
      %p210 = scmp.ne.s32.totalorder %s195, %s209
      %p211 = scmp.eq.s32.totalorder %s28, 0
      %p212 = por %p210, %p211
      %s214 = sadd.s32 %s213, 1
      %p217 = scmp.eq.s32.totalorder %s22, 1
      %p218 = scmp.ne.s32.totalorder %s213, %s215
      %p219 = scmp.eq.s32.totalorder %s22, 0
      %p220 = por %p218, %p219
      %p221 = scmp.ne.s32.totalorder %s213, %s215
      %p222 = scmp.eq.s32.totalorder %s27, 1
      %p223 = por %p221, %p222
      %p224 = scmp.ne.s32.totalorder %s215, %s216
      %p225 = scmp.eq.s32.totalorder %s27, 0
      %p226 = por %p224, %p225
      %p227 = scmp.ne.s32.totalorder %s215, %s216
      %p228 = scmp.eq.s32.totalorder %s28, 1
      %p229 = por %p227, %p228
      %p231 = scmp.ne.s32.totalorder %s216, %s230
      %p232 = scmp.eq.s32.totalorder %s28, 0
      %p233 = por %p231, %p232
      %s235 = sadd.s32 %s234, 1
      %p238 = scmp.eq.s32.totalorder %s22, 1
      %p239 = scmp.ne.s32.totalorder %s234, %s236
      %p240 = scmp.eq.s32.totalorder %s22, 0
      %p241 = por %p239, %p240
      %p242 = scmp.ne.s32.totalorder %s234, %s236
      %p243 = scmp.eq.s32.totalorder %s27, 1
      %p244 = por %p242, %p243
      %p245 = scmp.ne.s32.totalorder %s236, %s237
      %p246 = scmp.eq.s32.totalorder %s27, 0
      %p247 = por %p245, %p246
      %p248 = scmp.ne.s32.totalorder %s236, %s237
      %p249 = scmp.eq.s32.totalorder %s28, 1
      %p250 = por %p248, %p249
      %p252 = scmp.ne.s32.totalorder %s237, %s251
      %p253 = scmp.eq.s32.totalorder %s28, 0
      %p254 = por %p252, %p253
      %s256 = sadd.s32 %s255, 1
      %p259 = scmp.eq.s32.totalorder %s22, 1
      %p260 = scmp.ne.s32.totalorder %s255, %s257
      %p261 = scmp.eq.s32.totalorder %s22, 0
      %p262 = por %p260, %p261
      %p263 = scmp.ne.s32.totalorder %s255, %s257
      %p264 = scmp.eq.s32.totalorder %s27, 1
      %p265 = por %p263, %p264
      %p266 = scmp.ne.s32.totalorder %s257, %s258
      %p267 = scmp.eq.s32.totalorder %s27, 0
      %p268 = por %p266, %p267
      %p269 = scmp.ne.s32.totalorder %s257, %s258
      %p270 = scmp.eq.s32.totalorder %s28, 1
      %p271 = por %p269, %p270
      %p273 = scmp.ne.s32.totalorder %s258, %s272
      %p274 = scmp.eq.s32.totalorder %s28, 0
      %p275 = por %p273, %p274
      %s277 = sadd.s32 %s276, 1
      %p280 = scmp.eq.s32.totalorder %s22, 1
      %p281 = scmp.ne.s32.totalorder %s276, %s278
      %p282 = scmp.eq.s32.totalorder %s22, 0
      %p283 = por %p281, %p282
      %p284 = scmp.ne.s32.totalorder %s276, %s278
      %p285 = scmp.eq.s32.totalorder %s27, 1
      %p286 = por %p284, %p285
      %p287 = scmp.ne.s32.totalorder %s278, %s279
      %p288 = scmp.eq.s32.totalorder %s27, 0
      %p289 = por %p287, %p288
      %p290 = scmp.ne.s32.totalorder %s278, %s279
      %p291 = scmp.eq.s32.totalorder %s28, 1
      %p292 = por %p290, %p291
      %p294 = scmp.ne.s32.totalorder %s279, %s293
      %p295 = scmp.eq.s32.totalorder %s28, 0
      %p296 = por %p294, %p295
      %s298 = sadd.s32 %s297, 1
      %p301 = scmp.eq.s32.totalorder %s22, 1
      %p302 = scmp.ne.s32.totalorder %s297, %s299
      %p303 = scmp.eq.s32.totalorder %s22, 0
      %p304 = por %p302, %p303
      %p305 = scmp.ne.s32.totalorder %s297, %s299
      %p306 = scmp.eq.s32.totalorder %s27, 1
      %p307 = por %p305, %p306
      %p308 = scmp.ne.s32.totalorder %s299, %s300
      %p309 = scmp.eq.s32.totalorder %s27, 0
      %p310 = por %p308, %p309
      %p311 = scmp.ne.s32.totalorder %s299, %s300
      %p312 = scmp.eq.s32.totalorder %s28, 1
      %p313 = por %p311, %p312
      %p315 = scmp.ne.s32.totalorder %s300, %s314
      %p316 = scmp.eq.s32.totalorder %s28, 0
      %p317 = por %p315, %p316
      %s318 = ssub.s32 %s22, %s29
      %p319 = scmp.eq.s32.totalorder %s318, 0
      %s321 = sadd.s32 %s320, 1
      %s322 = scalar_select %p319, %s320, %s321
      %p325 = pneg %p319
      %p326 = scmp.eq.s32.totalorder %s22, 1
      %p327 = por %p325, %p326
      %p328 = scmp.ne.s32.totalorder %s320, %s323
      %p329 = scmp.eq.s32.totalorder %s22, 0
      %p330 = por %p328, %p329
      %p331 = scmp.ne.s32.totalorder %s320, %s323
      %p332 = scmp.eq.s32.totalorder %s27, 1
      %p333 = por %p331, %p332
      %p334 = scmp.ne.s32.totalorder %s323, %s324
      %p335 = scmp.eq.s32.totalorder %s27, 0
      %p336 = por %p334, %p335
      %p337 = scmp.ne.s32.totalorder %s323, %s324
      %p338 = scmp.eq.s32.totalorder %s28, 1
      %p339 = por %p337, %p338
      %p341 = scmp.ne.s32.totalorder %s324, %s340
      %p342 = scmp.eq.s32.totalorder %s28, 0
      %p343 = por %p341, %p342
      %p344 = scmp.le.s32.totalorder 1, %s22
      %p345 = scmp.lt.s32.totalorder %s22, 3
      %p346 = pnand %p344, %p345
      %p347 = pneg %p346
      // Predicated region
      $region9: #{tpu_custom_call.1} parent=5 // pred_check
        _
      $region10: #{tpu_custom_call.1} parent=5 // pred_check_branch
        %349 = sbr.rel (%p346) target = $region12
      $region11: #{tpu_custom_call.1} parent=5 // pred_region
        %s350 = ssub.s32 %s22, 1
        // Predicated region
        $region13: #{tpu_custom_call.1} parent=11 // pred_check
          %p351 = pneg %p121
        $region14: #{tpu_custom_call.1} parent=11 // pred_check_branch
          %353 = sbr.rel (%p351) target = $region16
        $region15: #{tpu_custom_call.1} parent=11 // pred_region
          _
        $region16: #{tpu_custom_call.1} parent=11 // pred_fallthru
          _
        // Predicated region
        $region17: #{tpu_custom_call.1} parent=11 // pred_check
          %p354 = pneg %p142
        $region18: #{tpu_custom_call.1} parent=11 // pred_check_branch
          %356 = sbr.rel (%p354) target = $region20
        $region19: #{tpu_custom_call.1} parent=11 // pred_region
          _
        $region20: #{tpu_custom_call.1} parent=11 // pred_fallthru
          _
        // Predicated region
        $region21: #{tpu_custom_call.1} parent=11 // pred_check
          %p357 = pneg %p163
        $region22: #{tpu_custom_call.1} parent=11 // pred_check_branch
          %359 = sbr.rel (%p357) target = $region24
        $region23: #{tpu_custom_call.1} parent=11 // pred_region
          _
        $region24: #{tpu_custom_call.1} parent=11 // pred_fallthru
          _
        // Predicated region
        $region25: #{tpu_custom_call.1} parent=11 // pred_check
          %p360 = pneg %p184
        $region26: #{tpu_custom_call.1} parent=11 // pred_check_branch
          %362 = sbr.rel (%p360) target = $region28
        $region27: #{tpu_custom_call.1} parent=11 // pred_region
          _
        $region28: #{tpu_custom_call.1} parent=11 // pred_fallthru
          _
        // Predicated region
        $region29: #{tpu_custom_call.1} parent=11 // pred_check
          %p363 = pneg %p205
        $region30: #{tpu_custom_call.1} parent=11 // pred_check_branch
          %365 = sbr.rel (%p363) target = $region32
        $region31: #{tpu_custom_call.1} parent=11 // pred_region
          _
        $region32: #{tpu_custom_call.1} parent=11 // pred_fallthru
          _
        // Predicated region
        $region33: #{tpu_custom_call.1} parent=11 // pred_check
          %p366 = pneg %p226
        $region34: #{tpu_custom_call.1} parent=11 // pred_check_branch
          %368 = sbr.rel (%p366) target = $region36
        $region35: #{tpu_custom_call.1} parent=11 // pred_region
          _
        $region36: #{tpu_custom_call.1} parent=11 // pred_fallthru
          _
        // Predicated region
        $region37: #{tpu_custom_call.1} parent=11 // pred_check
          %p369 = pneg %p247
        $region38: #{tpu_custom_call.1} parent=11 // pred_check_branch
          %371 = sbr.rel (%p369) target = $region40
        $region39: #{tpu_custom_call.1} parent=11 // pred_region
          _
        $region40: #{tpu_custom_call.1} parent=11 // pred_fallthru
          _
        // Predicated region
        $region41: #{tpu_custom_call.1} parent=11 // pred_check
          %p372 = pneg %p268
        $region42: #{tpu_custom_call.1} parent=11 // pred_check_branch
          %374 = sbr.rel (%p372) target = $region44
        $region43: #{tpu_custom_call.1} parent=11 // pred_region
          _
        $region44: #{tpu_custom_call.1} parent=11 // pred_fallthru
          _
        // Predicated region
        $region45: #{tpu_custom_call.1} parent=11 // pred_check
          %p375 = pneg %p289
        $region46: #{tpu_custom_call.1} parent=11 // pred_check_branch
          %377 = sbr.rel (%p375) target = $region48
        $region47: #{tpu_custom_call.1} parent=11 // pred_region
          _
        $region48: #{tpu_custom_call.1} parent=11 // pred_fallthru
          _
        // Predicated region
        $region49: #{tpu_custom_call.1} parent=11 // pred_check
          %p378 = pneg %p310
        $region50: #{tpu_custom_call.1} parent=11 // pred_check_branch
          %380 = sbr.rel (%p378) target = $region52
        $region51: #{tpu_custom_call.1} parent=11 // pred_region
          _
        $region52: #{tpu_custom_call.1} parent=11 // pred_fallthru
          _
      $region12: #{tpu_custom_call.1} parent=5 // pred_fallthru
        _
      %p381 = scmp.lt.s32.totalorder %s22, 2
      // Predicated region
      $region53: #{tpu_custom_call.1} parent=5 // pred_check
        %p382 = pneg %p381
      $region54: #{tpu_custom_call.1} parent=5 // pred_check_branch
        %384 = sbr.rel (%p382) target = $region56
      $region55: #{tpu_custom_call.1} parent=5 // pred_region
        // Predicated region
        $region57: #{tpu_custom_call.1} parent=55 // pred_check
          %p385 = pneg %p42
        $region58: #{tpu_custom_call.1} parent=55 // pred_check_branch
          %387 = sbr.rel (%p385) target = $region60
        $region59: #{tpu_custom_call.1} parent=55 // pred_region
          %p388 = scmp.lt.s32.totalorder %s22, 1
          %s389 = scalar_select %p388, %s22, 1
          %s390 = smul.addr %s389, 16
          %s391 = smul.addr %s390, 4
          %s392 = scalar_lea.vmem %s0, %s391
        $region60: #{tpu_custom_call.1} parent=55 // pred_fallthru
          _
        // Predicated region
        $region61: #{tpu_custom_call.1} parent=55 // pred_check
          %p393 = pneg %p68
        $region62: #{tpu_custom_call.1} parent=55 // pred_check_branch
          %395 = sbr.rel (%p393) target = $region64
        $region63: #{tpu_custom_call.1} parent=55 // pred_region
          %p396 = scmp.lt.s32.totalorder %s22, 1
          %s397 = scalar_select %p396, %s22, 1
          %s398 = smul.addr %s397, 16
          %s399 = smul.addr %s398, 8
          %s400 = scalar_lea.vmem %s1, %s399
        $region64: #{tpu_custom_call.1} parent=55 // pred_fallthru
          _
        // Predicated region
        $region65: #{tpu_custom_call.1} parent=55 // pred_check
          %p401 = pneg %p94
        $region66: #{tpu_custom_call.1} parent=55 // pred_check_branch
          %403 = sbr.rel (%p401) target = $region68
        $region67: #{tpu_custom_call.1} parent=55 // pred_region
          %p404 = scmp.lt.s32.totalorder %s22, 1
          %s405 = scalar_select %p404, %s22, 1
          %s406 = smul.addr %s405, 16
          %s407 = smul.addr %s406, 8
          %s408 = scalar_lea.vmem %s2, %s407
        $region68: #{tpu_custom_call.1} parent=55 // pred_fallthru
          _
      $region56: #{tpu_custom_call.1} parent=5 // pred_fallthru
        _
      %p409 = scmp.le.s32.totalorder 1, %s22
      %p410 = scmp.lt.s32.totalorder %s22, 3
      %p411 = pnand %p409, %p410
      %p412 = pneg %p411
      // Predicated region
      $region69: #{tpu_custom_call.1} parent=5 // pred_check
        _
      $region70: #{tpu_custom_call.1} parent=5 // pred_check_branch
        %414 = sbr.rel (%p411) target = $region72
      $region71: #{tpu_custom_call.1} parent=5 // pred_region
        %s415 = ssub.s32 %s22, 1
        %p416 = scmp.lt.s32.totalorder %s27, 1
        %s417 = scalar_select %p416, %s27, 1
        %s418 = smul.addr %s417, 16
        %s419 = smul.addr %s418, 4
        %s420 = scalar_lea.vmem %s0, %s419
        %p421 = pneg %p48
        %p422 = pneg %p45
        %p423 = scmp.lt.s32.totalorder %s27, 1
        %s424 = scalar_select %p423, %s27, 1
        %s425 = smul.addr %s424, 16
        %s426 = smul.addr %s425, 8
        %s427 = scalar_lea.vmem %s1, %s426
        %p428 = pneg %p74
        %p429 = pneg %p71
        %p430 = scmp.lt.s32.totalorder %s27, 1
        %s431 = scalar_select %p430, %s27, 1
        %s432 = smul.addr %s431, 16
        %s433 = smul.addr %s432, 8
        %s434 = scalar_lea.vmem %s2, %s433
        %p435 = pneg %p100
        %p436 = pneg %p97
        %p437 = pneg %p121
        %p438 = pneg %p118
        %p439 = pneg %p142
        %p440 = pneg %p139
        %p441 = pneg %p163
        %p442 = pneg %p160
        %p443 = pneg %p184
        %p444 = pneg %p181
        %p445 = pneg %p205
        %p446 = pneg %p202
        %p447 = pneg %p226
        %p448 = pneg %p223
        %p449 = pneg %p247
        %p450 = pneg %p244
        %p451 = pneg %p268
        %p452 = pneg %p265
        %p453 = pneg %p289
        %p454 = pneg %p286
        %p455 = pneg %p310
        %p456 = pneg %p307
        %p457 = pneg %p336
        %p458 = pneg %p333
        %s459 = sand.u32 %s323, 1
        %s460 = scalar_lea.sflag [#allocation3], %s459
        %s461 = sand.u32 %s323, 1
        %s462 = smul.addr %s461, 128
        %s463 = scalar_lea.vmem [#allocation2], %s462
        %p464 = scmp.lt.s32.totalorder %s27, 1
        %s465 = scalar_select %p464, %s27, 1
        %s466 = smul.addr %s465, 16
        %s467 = smul.addr %s466, 4
        %s468 = scalar_lea.vmem %s0, %s467
        %p469 = scmp.lt.s32.totalorder %s27, 1
        %s470 = scalar_select %p469, %s27, 1
        %s471 = smul.addr %s470, 16
        %s472 = smul.addr %s471, 8
        %s473 = scalar_lea.vmem %s1, %s472
        %p474 = scmp.lt.s32.totalorder %s27, 1
        %s475 = scalar_select %p474, %s27, 1
        %s476 = smul.addr %s475, 16
        %s477 = smul.addr %s476, 8
        %s478 = scalar_lea.vmem %s2, %s477
        %v480 = vld [vmem:[%s468] sm:$0xf]
        %v481 = vld [vmem:[%s468 + $0x4] sm:$0xf]
        %v482 = vld [vmem:[%s468 + $0x8] sm:$0xf]
        %v483 = vld [vmem:[%s468 + $0xc] sm:$0xf]
        %v484 = vld [vmem:[%s468 + $0x10] sm:$0xf]
        %v485 = vld [vmem:[%s468 + $0x14] sm:$0xf]
        %v486 = vld [vmem:[%s468 + $0x18] sm:$0xf]
        %v487 = vld [vmem:[%s468 + $0x1c] sm:$0xf]
        %v488 = vld [vmem:[%s468 + $0x20] sm:$0xf]
        %v489 = vld [vmem:[%s468 + $0x24] sm:$0xf]
        %v490 = vld [vmem:[%s468 + $0x28] sm:$0xf]
        %v491 = vld [vmem:[%s468 + $0x2c] sm:$0xf]
        %v492 = vld [vmem:[%s468 + $0x30] sm:$0xf]
        %v493 = vld [vmem:[%s468 + $0x34] sm:$0xf]
        %v494 = vld [vmem:[%s468 + $0x38] sm:$0xf]
        %v495 = vld [vmem:[%s468 + $0x3c] sm:$0xf]
        %v496 = vld [vmem:[%s473] sm:$0xff]
        %v497 = vld [vmem:[%s473 + $0x8] sm:$0xff]
        %v498 = vld [vmem:[%s473 + $0x10] sm:$0xff]
        %v499 = vld [vmem:[%s473 + $0x18] sm:$0xff]
        %v500 = vld [vmem:[%s473 + $0x20] sm:$0xff]
        %v501 = vld [vmem:[%s473 + $0x28] sm:$0xff]
        %v502 = vld [vmem:[%s473 + $0x30] sm:$0xff]
        %v503 = vld [vmem:[%s473 + $0x38] sm:$0xff]
        %v504 = vld [vmem:[%s473 + $0x40] sm:$0xff]
        %v505 = vld [vmem:[%s473 + $0x48] sm:$0xff]
        %v506 = vld [vmem:[%s473 + $0x50] sm:$0xff]
        %v507 = vld [vmem:[%s473 + $0x58] sm:$0xff]
        %v508 = vld [vmem:[%s473 + $0x60] sm:$0xff]
        %v509 = vld [vmem:[%s473 + $0x68] sm:$0xff]
        %v510 = vld [vmem:[%s473 + $0x70] sm:$0xff]
        %v511 = vld [vmem:[%s473 + $0x78] sm:$0xff]
        %v512 = vld [vmem:[%s478] sm:$0xff]
        %v513 = vld [vmem:[%s478 + $0x8] sm:$0xff]
        %v514 = vld [vmem:[%s478 + $0x10] sm:$0xff]
        %v515 = vld [vmem:[%s478 + $0x18] sm:$0xff]
        %v516 = vld [vmem:[%s478 + $0x20] sm:$0xff]
        %v517 = vld [vmem:[%s478 + $0x28] sm:$0xff]
        %v518 = vld [vmem:[%s478 + $0x30] sm:$0xff]
        %v519 = vld [vmem:[%s478 + $0x38] sm:$0xff]
        %v520 = vld [vmem:[%s478 + $0x40] sm:$0xff]
        %v521 = vld [vmem:[%s478 + $0x48] sm:$0xff]
        %v522 = vld [vmem:[%s478 + $0x50] sm:$0xff]
        %v523 = vld [vmem:[%s478 + $0x58] sm:$0xff]
        %v524 = vld [vmem:[%s478 + $0x60] sm:$0xff]
        %v525 = vld [vmem:[%s478 + $0x68] sm:$0xff]
        %v526 = vld [vmem:[%s478 + $0x70] sm:$0xff]
        %v527 = vld [vmem:[%s478 + $0x78] sm:$0xff]
        %529 = vset.pattern.permute.xlu0 0
        %530 = vperm.xlu0 %529, %v496
        %v531 = vpop.permute.xlu0 %530
        %534 = vset.pattern.permute.xlu0 0
        %535 = vperm.xlu0 %534, %v497
        %v536 = vpop.permute.xlu0 %535
        %539 = vset.pattern.permute.xlu0 0
        %540 = vperm.xlu0 %539, %v498
        %v541 = vpop.permute.xlu0 %540
        %544 = vset.pattern.permute.xlu0 0
        %545 = vperm.xlu0 %544, %v499
        %v546 = vpop.permute.xlu0 %545
        %549 = vset.pattern.permute.xlu0 0
        %550 = vperm.xlu0 %549, %v500
        %v551 = vpop.permute.xlu0 %550
        %554 = vset.pattern.permute.xlu0 0
        %555 = vperm.xlu0 %554, %v501
        %v556 = vpop.permute.xlu0 %555
        %559 = vset.pattern.permute.xlu0 0
        %560 = vperm.xlu0 %559, %v502
        %v561 = vpop.permute.xlu0 %560
        %564 = vset.pattern.permute.xlu0 0
        %565 = vperm.xlu0 %564, %v503
        %v566 = vpop.permute.xlu0 %565
        %569 = vset.pattern.permute.xlu0 0
        %570 = vperm.xlu0 %569, %v504
        %v571 = vpop.permute.xlu0 %570
        %574 = vset.pattern.permute.xlu0 0
        %575 = vperm.xlu0 %574, %v505
        %v576 = vpop.permute.xlu0 %575
        %579 = vset.pattern.permute.xlu0 0
        %580 = vperm.xlu0 %579, %v506
        %v581 = vpop.permute.xlu0 %580
        %584 = vset.pattern.permute.xlu0 0
        %585 = vperm.xlu0 %584, %v507
        %v586 = vpop.permute.xlu0 %585
        %589 = vset.pattern.permute.xlu0 0
        %590 = vperm.xlu0 %589, %v508
        %v591 = vpop.permute.xlu0 %590
        %594 = vset.pattern.permute.xlu0 0
        %595 = vperm.xlu0 %594, %v509
        %v596 = vpop.permute.xlu0 %595
        %599 = vset.pattern.permute.xlu0 0
        %600 = vperm.xlu0 %599, %v510
        %v601 = vpop.permute.xlu0 %600
        %604 = vset.pattern.permute.xlu0 0
        %605 = vperm.xlu0 %604, %v511
        %v606 = vpop.permute.xlu0 %605
        %v608 = vmul.f32 %v512, %v531
        %v609 = vmul.f32 %v513, %v536
        %v610 = vmul.f32 %v514, %v541
        %v611 = vmul.f32 %v515, %v546
        %v612 = vmul.f32 %v516, %v551
        %v613 = vmul.f32 %v517, %v556
        %v614 = vmul.f32 %v518, %v561
        %v615 = vmul.f32 %v519, %v566
        %v616 = vmul.f32 %v520, %v571
        %v617 = vmul.f32 %v521, %v576
        %v618 = vmul.f32 %v522, %v581
        %v619 = vmul.f32 %v523, %v586
        %v620 = vmul.f32 %v524, %v591
        %v621 = vmul.f32 %v525, %v596
        %v622 = vmul.f32 %v526, %v601
        %v623 = vmul.f32 %v527, %v606
        %v624 = vpack.c.bf16 %v609, %v608
        %v625 = vpack.c.bf16 %v611, %v610
        %v626 = vpack.c.bf16 %v613, %v612
        %v627 = vpack.c.bf16 %v615, %v614
        %v628 = vpack.c.bf16 %v617, %v616
        %v629 = vpack.c.bf16 %v619, %v618
        %v630 = vpack.c.bf16 %v621, %v620
        %v631 = vpack.c.bf16 %v623, %v622
        %v648 = vunpack.c.l.b16 %v480
        %v649 = vunpack.c.l.b16 %v481
        %v650 = vunpack.c.l.b16 %v482
        %v651 = vunpack.c.l.b16 %v483
        %v652 = vunpack.c.l.b16 %v484
        %v653 = vunpack.c.l.b16 %v485
        %v654 = vunpack.c.l.b16 %v486
        %v655 = vunpack.c.l.b16 %v487
        %v656 = vunpack.c.l.b16 %v488
        %v657 = vunpack.c.l.b16 %v489
        %v658 = vunpack.c.l.b16 %v490
        %v659 = vunpack.c.l.b16 %v491
        %v660 = vunpack.c.l.b16 %v492
        %v661 = vunpack.c.l.b16 %v493
        %v662 = vunpack.c.l.b16 %v494
        %v663 = vunpack.c.l.b16 %v495
        %v664 = vpack.c.b16 %v649, %v648
        %v665 = vpack.c.b16 %v651, %v650
        %v666 = vpack.c.b16 %v653, %v652
        %v667 = vpack.c.b16 %v655, %v654
        %v668 = vpack.c.b16 %v657, %v656
        %v669 = vpack.c.b16 %v659, %v658
        %v670 = vpack.c.b16 %v661, %v660
        %v671 = vpack.c.b16 %v663, %v662
        %680 = vmatpush.bf16.msra.mxu0 %v631
        %681 = vmatpush.bf16.msra.mxu0 %v630
        %682 = vmatpush.bf16.msra.mxu0 %v629
        %683 = vmatpush.bf16.msra.mxu0 %v628
        %684 = vmatpush.bf16.msra.mxu0 %v627
        %685 = vmatpush.bf16.msra.mxu0 %v626
        %686 = vmatpush.bf16.msra.mxu0 %v625
        %687 = vmatpush.bf16.msra.mxu0 %v624
        %688 = vmatmul.bf16.gmra.mxu0 %v664
        %v689 = vpop.f32.mrf.mxu0
        %v690 = vadd.f32 0.0, %v689
        %v691 = vpop.f32.mrf.mxu0
        %v692 = vadd.f32 0.0, %v691
        %693 = vmatmul.bf16.gmra.mxu0 %v665
        %v694 = vpop.f32.mrf.mxu0
        %v695 = vadd.f32 0.0, %v694
        %v696 = vpop.f32.mrf.mxu0
        %v697 = vadd.f32 0.0, %v696
        %698 = vmatmul.bf16.gmra.mxu0 %v666
        %v699 = vpop.f32.mrf.mxu0
        %v700 = vadd.f32 0.0, %v699
        %v701 = vpop.f32.mrf.mxu0
        %v702 = vadd.f32 0.0, %v701
        %703 = vmatmul.bf16.gmra.mxu0 %v667
        %v704 = vpop.f32.mrf.mxu0
        %v705 = vadd.f32 0.0, %v704
        %v706 = vpop.f32.mrf.mxu0
        %v707 = vadd.f32 0.0, %v706
        %708 = vmatmul.bf16.gmra.mxu0 %v668
        %v709 = vpop.f32.mrf.mxu0
        %v710 = vadd.f32 0.0, %v709
        %v711 = vpop.f32.mrf.mxu0
        %v712 = vadd.f32 0.0, %v711
        %713 = vmatmul.bf16.gmra.mxu0 %v669
        %v714 = vpop.f32.mrf.mxu0
        %v715 = vadd.f32 0.0, %v714
        %v716 = vpop.f32.mrf.mxu0
        %v717 = vadd.f32 0.0, %v716
        %718 = vmatmul.bf16.gmra.mxu0 %v670
        %v719 = vpop.f32.mrf.mxu0
        %v720 = vadd.f32 0.0, %v719
        %v721 = vpop.f32.mrf.mxu0
        %v722 = vadd.f32 0.0, %v721
        %723 = vmatmul.bf16.gmra.mxu0 %v671
        %v724 = vpop.f32.mrf.mxu0
        %v725 = vadd.f32 0.0, %v724
        %v726 = vpop.f32.mrf.mxu0
        %v727 = vadd.f32 0.0, %v726
        %728 = vdwg.mxu0
        %v729 = vmul.f32 %v690, %v531
        %v730 = vmul.f32 %v692, %v536
        %v731 = vmul.f32 %v695, %v541
        %v732 = vmul.f32 %v697, %v546
        %v733 = vmul.f32 %v700, %v551
        %v734 = vmul.f32 %v702, %v556
        %v735 = vmul.f32 %v705, %v561
        %v736 = vmul.f32 %v707, %v566
        %v737 = vmul.f32 %v710, %v571
        %v738 = vmul.f32 %v712, %v576
        %v739 = vmul.f32 %v715, %v581
        %v740 = vmul.f32 %v717, %v586
        %v741 = vmul.f32 %v720, %v591
        %v742 = vmul.f32 %v722, %v596
        %v743 = vmul.f32 %v725, %v601
        %v744 = vmul.f32 %v727, %v606
        %v745 = vpack.c.bf16 %v730, %v729
        %v746 = vpack.c.bf16 %v732, %v731
        %v747 = vpack.c.bf16 %v734, %v733
        %v748 = vpack.c.bf16 %v736, %v735
        %v749 = vpack.c.bf16 %v738, %v737
        %v750 = vpack.c.bf16 %v740, %v739
        %v751 = vpack.c.bf16 %v742, %v741
        %v752 = vpack.c.bf16 %v744, %v743
        %v753 = vld [vmem:[%s3] sm:$0xf]
        %v754 = vld [vmem:[%s4] sm:$0x1]
        %v756 = vperm.slane %v754, 0
        %vm758 = vcmask 64512
        %v760 = vsel %vm758, %v745, 0
        %v763 = vsel %vm758, %v746, 0
        %v766 = vsel %vm758, %v747, 0
        %v769 = vsel %vm758, %v748, 0
        %v772 = vsel %vm758, %v749, 0
        %v775 = vsel %vm758, %v750, 0
        %v778 = vsel %vm758, %v751, 0
        %v781 = vsel %vm758, %v752, 0
        %vm783 = vcmask 1043456
        %v785 = vsel %vm783, %v753, 0
        %787 = vmatpush.bf16.msra.mxu0 0
        %788 = vmatpush.bf16.msra.mxu0 0
        %789 = vmatpush.bf16.msra.mxu0 0
        %790 = vmatpush.bf16.msra.mxu0 0
        %791 = vmatpush.bf16.msra.mxu0 0
        %792 = vmatpush.bf16.msra.mxu0 0
        %793 = vmatpush.bf16.msra.mxu0 0
        %794 = vmatpush.bf16.msra.mxu0 %v785
        %795 = vmatmul.bf16.gmra.mxu0 %v760
        %v796 = vpop.f32.mrf.mxu0
        %v797 = vadd.f32 %v756, %v796
        %v798 = vpop.f32.mrf.mxu0
        %v799 = vadd.f32 %v756, %v798
        %800 = vmatmul.bf16.gmra.mxu0 %v763
        %v801 = vpop.f32.mrf.mxu0
        %v802 = vadd.f32 %v756, %v801
        %v803 = vpop.f32.mrf.mxu0
        %v804 = vadd.f32 %v756, %v803
        %805 = vmatmul.bf16.gmra.mxu0 %v766
        %v806 = vpop.f32.mrf.mxu0
        %v807 = vadd.f32 %v756, %v806
        %v808 = vpop.f32.mrf.mxu0
        %v809 = vadd.f32 %v756, %v808
        %810 = vmatmul.bf16.gmra.mxu0 %v769
        %v811 = vpop.f32.mrf.mxu0
        %v812 = vadd.f32 %v756, %v811
        %v813 = vpop.f32.mrf.mxu0
        %v814 = vadd.f32 %v756, %v813
        %815 = vmatmul.bf16.gmra.mxu0 %v772
        %v816 = vpop.f32.mrf.mxu0
        %v817 = vadd.f32 %v756, %v816
        %v818 = vpop.f32.mrf.mxu0
        %v819 = vadd.f32 %v756, %v818
        %820 = vmatmul.bf16.gmra.mxu0 %v775
        %v821 = vpop.f32.mrf.mxu0
        %v822 = vadd.f32 %v756, %v821
        %v823 = vpop.f32.mrf.mxu0
        %v824 = vadd.f32 %v756, %v823
        %825 = vmatmul.bf16.gmra.mxu0 %v778
        %v826 = vpop.f32.mrf.mxu0
        %v827 = vadd.f32 %v756, %v826
        %v828 = vpop.f32.mrf.mxu0
        %v829 = vadd.f32 %v756, %v828
        %830 = vmatmul.bf16.gmra.mxu0 %v781
        %v831 = vpop.f32.mrf.mxu0
        %v832 = vadd.f32 %v756, %v831
        %v833 = vpop.f32.mrf.mxu0
        %v834 = vadd.f32 %v756, %v833
        %835 = vdwg.mxu0
        %v836 = vmax.f32 %v797, 0.0
        %v837 = vmax.f32 %v799, 0.0
        %v838 = vmax.f32 %v802, 0.0
        %v839 = vmax.f32 %v804, 0.0
        %v840 = vmax.f32 %v807, 0.0
        %v841 = vmax.f32 %v809, 0.0
        %v842 = vmax.f32 %v812, 0.0
        %v843 = vmax.f32 %v814, 0.0
        %v844 = vmax.f32 %v817, 0.0
        %v845 = vmax.f32 %v819, 0.0
        %v846 = vmax.f32 %v822, 0.0
        %v847 = vmax.f32 %v824, 0.0
        %v848 = vmax.f32 %v827, 0.0
        %v849 = vmax.f32 %v829, 0.0
        %v850 = vmax.f32 %v832, 0.0
        %v851 = vmax.f32 %v834, 0.0
        %v852 = vmul.f32 %v836, %v531
        %v853 = vmul.f32 %v837, %v536
        %v854 = vmul.f32 %v838, %v541
        %v855 = vmul.f32 %v839, %v546
        %v856 = vmul.f32 %v840, %v551
        %v857 = vmul.f32 %v841, %v556
        %v858 = vmul.f32 %v842, %v561
        %v859 = vmul.f32 %v843, %v566
        %v860 = vmul.f32 %v844, %v571
        %v861 = vmul.f32 %v845, %v576
        %v862 = vmul.f32 %v846, %v581
        %v863 = vmul.f32 %v847, %v586
        %v864 = vmul.f32 %v848, %v591
        %v865 = vmul.f32 %v849, %v596
        %v866 = vmul.f32 %v850, %v601
        %v867 = vmul.f32 %v851, %v606
        %v868 = vpack.c.bf16 %v853, %v852
        %v869 = vpack.c.bf16 %v855, %v854
        %v870 = vpack.c.bf16 %v857, %v856
        %v871 = vpack.c.bf16 %v859, %v858
        %v872 = vpack.c.bf16 %v861, %v860
        %v873 = vpack.c.bf16 %v863, %v862
        %v874 = vpack.c.bf16 %v865, %v864
        %v875 = vpack.c.bf16 %v867, %v866
        %876 = vmatpush.bf16.msra.mxu0 %v875
        %877 = vmatpush.bf16.msra.mxu0 %v874
        %878 = vmatpush.bf16.msra.mxu0 %v873
        %879 = vmatpush.bf16.msra.mxu0 %v872
        %880 = vmatpush.bf16.msra.mxu0 %v871
        %881 = vmatpush.bf16.msra.mxu0 %v870
        %882 = vmatpush.bf16.msra.mxu0 %v869
        %883 = vmatpush.bf16.msra.mxu0 %v868
        %884 = vmatmul.bf16.gmra.mxu0 %v664
        %v885 = vpop.f32.mrf.mxu0
        %v886 = vadd.f32 0.0, %v885
        %v887 = vpop.f32.mrf.mxu0
        %v888 = vadd.f32 0.0, %v887
        %889 = vmatmul.bf16.gmra.mxu0 %v665
        %v890 = vpop.f32.mrf.mxu0
        %v891 = vadd.f32 0.0, %v890
        %v892 = vpop.f32.mrf.mxu0
        %v893 = vadd.f32 0.0, %v892
        %894 = vmatmul.bf16.gmra.mxu0 %v666
        %v895 = vpop.f32.mrf.mxu0
        %v896 = vadd.f32 0.0, %v895
        %v897 = vpop.f32.mrf.mxu0
        %v898 = vadd.f32 0.0, %v897
        %899 = vmatmul.bf16.gmra.mxu0 %v667
        %v900 = vpop.f32.mrf.mxu0
        %v901 = vadd.f32 0.0, %v900
        %v902 = vpop.f32.mrf.mxu0
        %v903 = vadd.f32 0.0, %v902
        %904 = vmatmul.bf16.gmra.mxu0 %v668
        %v905 = vpop.f32.mrf.mxu0
        %v906 = vadd.f32 0.0, %v905
        %v907 = vpop.f32.mrf.mxu0
        %v908 = vadd.f32 0.0, %v907
        %909 = vmatmul.bf16.gmra.mxu0 %v669
        %v910 = vpop.f32.mrf.mxu0
        %v911 = vadd.f32 0.0, %v910
        %v912 = vpop.f32.mrf.mxu0
        %v913 = vadd.f32 0.0, %v912
        %914 = vmatmul.bf16.gmra.mxu0 %v670
        %v915 = vpop.f32.mrf.mxu0
        %v916 = vadd.f32 0.0, %v915
        %v917 = vpop.f32.mrf.mxu0
        %v918 = vadd.f32 0.0, %v917
        %919 = vmatmul.bf16.gmra.mxu0 %v671
        %v920 = vpop.f32.mrf.mxu0
        %v921 = vadd.f32 0.0, %v920
        %v922 = vpop.f32.mrf.mxu0
        %v923 = vadd.f32 0.0, %v922
        %924 = vdwg.mxu0
        %v925 = vmul.f32 %v886, %v531
        %v926 = vmul.f32 %v888, %v536
        %v927 = vmul.f32 %v891, %v541
        %v928 = vmul.f32 %v893, %v546
        %v929 = vmul.f32 %v896, %v551
        %v930 = vmul.f32 %v898, %v556
        %v931 = vmul.f32 %v901, %v561
        %v932 = vmul.f32 %v903, %v566
        %v933 = vmul.f32 %v906, %v571
        %v934 = vmul.f32 %v908, %v576
        %v935 = vmul.f32 %v911, %v581
        %v936 = vmul.f32 %v913, %v586
        %v937 = vmul.f32 %v916, %v591
        %v938 = vmul.f32 %v918, %v596
        %v939 = vmul.f32 %v921, %v601
        %v940 = vmul.f32 %v923, %v606
        %v941 = vpack.c.bf16 %v926, %v925
        %v942 = vpack.c.bf16 %v928, %v927
        %v943 = vpack.c.bf16 %v930, %v929
        %v944 = vpack.c.bf16 %v932, %v931
        %v945 = vpack.c.bf16 %v934, %v933
        %v946 = vpack.c.bf16 %v936, %v935
        %v947 = vpack.c.bf16 %v938, %v937
        %v948 = vpack.c.bf16 %v940, %v939
        %v949 = vld [vmem:[%s5] sm:$0xf]
        %v950 = vld [vmem:[%s5 + $0x4] sm:$0xf]
        %v951 = vld [vmem:[%s5 + $0x8] sm:$0xf]
        %v952 = vld [vmem:[%s5 + $0xc] sm:$0xf]
        %v953 = vld [vmem:[%s5 + $0x10] sm:$0xf]
        %v954 = vld [vmem:[%s5 + $0x14] sm:$0xf]
        %v955 = vld [vmem:[%s5 + $0x18] sm:$0xf]
        %v956 = vld [vmem:[%s5 + $0x1c] sm:$0xf]
        %v957 = vld [vmem:[%s6] sm:$0x1]
        %v959 = vperm.slane %v957, 0
        %v969 = vunpack.c.l.b16 %v949
        %v970 = vunpack.c.l.b16 %v950
        %v971 = vunpack.c.l.b16 %v951
        %v972 = vunpack.c.l.b16 %v952
        %v973 = vunpack.c.l.b16 %v953
        %v974 = vunpack.c.l.b16 %v954
        %v975 = vunpack.c.l.b16 %v955
        %v976 = vunpack.c.l.b16 %v956
        %v977 = vpack.c.b16 %v970, %v969
        %v978 = vpack.c.b16 %v972, %v971
        %v979 = vpack.c.b16 %v974, %v973
        %v980 = vpack.c.b16 %v976, %v975
        %vm985 = vcmask 523264
        %v987 = vsel %vm985, %v941, 0
        %v990 = vsel %vm985, %v942, 0
        %v993 = vsel %vm985, %v943, 0
        %v996 = vsel %vm985, %v944, 0
        %v999 = vsel %vm985, %v945, 0
        %v1002 = vsel %vm985, %v946, 0
        %v1005 = vsel %vm985, %v947, 0
        %v1008 = vsel %vm985, %v948, 0
        %1010 = vmatpush.bf16.msra.mxu0 0
        %1011 = vmatpush.bf16.msra.mxu0 0
        %1012 = vmatpush.bf16.msra.mxu0 0
        %1013 = vmatpush.bf16.msra.mxu0 0
        %1014 = vmatpush.bf16.msra.mxu0 %v980
        %1015 = vmatpush.bf16.msra.mxu0 %v979
        %1016 = vmatpush.bf16.msra.mxu0 %v978
        %1017 = vmatpush.bf16.msra.mxu0 %v977
        %1018 = vmatmul.bf16.gmra.mxu0 %v987
        %v1019 = vpop.f32.mrf.mxu0
        %v1020 = vadd.f32 %v959, %v1019
        %v1021 = vpop.f32.mrf.mxu0
        %v1022 = vadd.f32 %v959, %v1021
        %1023 = vmatmul.bf16.gmra.mxu0 %v990
        %v1024 = vpop.f32.mrf.mxu0
        %v1025 = vadd.f32 %v959, %v1024
        %v1026 = vpop.f32.mrf.mxu0
        %v1027 = vadd.f32 %v959, %v1026
        %1028 = vmatmul.bf16.gmra.mxu0 %v993
        %v1029 = vpop.f32.mrf.mxu0
        %v1030 = vadd.f32 %v959, %v1029
        %v1031 = vpop.f32.mrf.mxu0
        %v1032 = vadd.f32 %v959, %v1031
        %1033 = vmatmul.bf16.gmra.mxu0 %v996
        %v1034 = vpop.f32.mrf.mxu0
        %v1035 = vadd.f32 %v959, %v1034
        %v1036 = vpop.f32.mrf.mxu0
        %v1037 = vadd.f32 %v959, %v1036
        %1038 = vmatmul.bf16.gmra.mxu0 %v999
        %v1039 = vpop.f32.mrf.mxu0
        %v1040 = vadd.f32 %v959, %v1039
        %v1041 = vpop.f32.mrf.mxu0
        %v1042 = vadd.f32 %v959, %v1041
        %1043 = vmatmul.bf16.gmra.mxu0 %v1002
        %v1044 = vpop.f32.mrf.mxu0
        %v1045 = vadd.f32 %v959, %v1044
        %v1046 = vpop.f32.mrf.mxu0
        %v1047 = vadd.f32 %v959, %v1046
        %1048 = vmatmul.bf16.gmra.mxu0 %v1005
        %v1049 = vpop.f32.mrf.mxu0
        %v1050 = vadd.f32 %v959, %v1049
        %v1051 = vpop.f32.mrf.mxu0
        %v1052 = vadd.f32 %v959, %v1051
        %1053 = vmatmul.bf16.gmra.mxu0 %v1008
        %v1054 = vpop.f32.mrf.mxu0
        %v1055 = vadd.f32 %v959, %v1054
        %v1056 = vpop.f32.mrf.mxu0
        %v1057 = vadd.f32 %v959, %v1056
        %1058 = vdwg.mxu0
        %v1059 = vmax.f32 %v1020, 0.0
        %v1060 = vmax.f32 %v1022, 0.0
        %v1061 = vmax.f32 %v1025, 0.0
        %v1062 = vmax.f32 %v1027, 0.0
        %v1063 = vmax.f32 %v1030, 0.0
        %v1064 = vmax.f32 %v1032, 0.0
        %v1065 = vmax.f32 %v1035, 0.0
        %v1066 = vmax.f32 %v1037, 0.0
        %v1067 = vmax.f32 %v1040, 0.0
        %v1068 = vmax.f32 %v1042, 0.0
        %v1069 = vmax.f32 %v1045, 0.0
        %v1070 = vmax.f32 %v1047, 0.0
        %v1071 = vmax.f32 %v1050, 0.0
        %v1072 = vmax.f32 %v1052, 0.0
        %v1073 = vmax.f32 %v1055, 0.0
        %v1074 = vmax.f32 %v1057, 0.0
        %v1075 = vpack.c.bf16 %v1060, %v1059
        %v1076 = vpack.c.bf16 %v1062, %v1061
        %v1077 = vpack.c.bf16 %v1064, %v1063
        %v1078 = vpack.c.bf16 %v1066, %v1065
        %v1079 = vpack.c.bf16 %v1068, %v1067
        %v1080 = vpack.c.bf16 %v1070, %v1069
        %v1081 = vpack.c.bf16 %v1072, %v1071
        %v1082 = vpack.c.bf16 %v1074, %v1073
        %v1083 = vld [vmem:[%s7] sm:$0xf]
        %v1084 = vld [vmem:[%s7 + $0x4] sm:$0xf]
        %v1085 = vld [vmem:[%s7 + $0x8] sm:$0xf]
        %v1086 = vld [vmem:[%s7 + $0xc] sm:$0xf]
        %v1087 = vld [vmem:[%s7 + $0x10] sm:$0xf]
        %v1088 = vld [vmem:[%s7 + $0x14] sm:$0xf]
        %v1089 = vld [vmem:[%s7 + $0x18] sm:$0xf]
        %v1090 = vld [vmem:[%s7 + $0x1c] sm:$0xf]
        %v1091 = vld [vmem:[%s7 + $0x20] sm:$0xf]
        %v1092 = vld [vmem:[%s7 + $0x24] sm:$0xf]
        %v1093 = vld [vmem:[%s7 + $0x28] sm:$0xf]
        %v1094 = vld [vmem:[%s7 + $0x2c] sm:$0xf]
        %v1095 = vld [vmem:[%s7 + $0x30] sm:$0xf]
        %v1096 = vld [vmem:[%s7 + $0x34] sm:$0xf]
        %v1097 = vld [vmem:[%s7 + $0x38] sm:$0xf]
        %v1098 = vld [vmem:[%s7 + $0x3c] sm:$0xf]
        %v1115 = vunpack.c.l.b16 %v1083
        %v1116 = vunpack.c.l.b16 %v1084
        %v1117 = vunpack.c.l.b16 %v1085
        %v1118 = vunpack.c.l.b16 %v1086
        %v1119 = vunpack.c.l.b16 %v1087
        %v1120 = vunpack.c.l.b16 %v1088
        %v1121 = vunpack.c.l.b16 %v1089
        %v1122 = vunpack.c.l.b16 %v1090
        %v1123 = vunpack.c.l.b16 %v1091
        %v1124 = vunpack.c.l.b16 %v1092
        %v1125 = vunpack.c.l.b16 %v1093
        %v1126 = vunpack.c.l.b16 %v1094
        %v1127 = vunpack.c.l.b16 %v1095
        %v1128 = vunpack.c.l.b16 %v1096
        %v1129 = vunpack.c.l.b16 %v1097
        %v1130 = vunpack.c.l.b16 %v1098
        %v1131 = vpack.c.b16 %v1116, %v1115
        %v1132 = vpack.c.b16 %v1118, %v1117
        %v1133 = vpack.c.b16 %v1120, %v1119
        %v1134 = vpack.c.b16 %v1122, %v1121
        %v1135 = vpack.c.b16 %v1124, %v1123
        %v1136 = vpack.c.b16 %v1126, %v1125
        %v1137 = vpack.c.b16 %v1128, %v1127
        %v1138 = vpack.c.b16 %v1130, %v1129
        %1147 = vmatpush.bf16.msra.mxu0 %v1138
        %1148 = vmatpush.bf16.msra.mxu0 %v1137
        %1149 = vmatpush.bf16.msra.mxu0 %v1136
        %1150 = vmatpush.bf16.msra.mxu0 %v1135
        %1151 = vmatpush.bf16.msra.mxu0 %v1134
        %1152 = vmatpush.bf16.msra.mxu0 %v1133
        %1153 = vmatpush.bf16.msra.mxu0 %v1132
        %1154 = vmatpush.bf16.msra.mxu0 %v1131
        %1155 = vmatmul.bf16.gmra.mxu0 %v1075
        %v1156 = vpop.f32.mrf.mxu0
        %v1157 = vadd.f32 0.0, %v1156
        %v1158 = vpop.f32.mrf.mxu0
        %v1159 = vadd.f32 0.0, %v1158
        %1160 = vmatmul.bf16.gmra.mxu0 %v1076
        %v1161 = vpop.f32.mrf.mxu0
        %v1162 = vadd.f32 0.0, %v1161
        %v1163 = vpop.f32.mrf.mxu0
        %v1164 = vadd.f32 0.0, %v1163
        %1165 = vmatmul.bf16.gmra.mxu0 %v1077
        %v1166 = vpop.f32.mrf.mxu0
        %v1167 = vadd.f32 0.0, %v1166
        %v1168 = vpop.f32.mrf.mxu0
        %v1169 = vadd.f32 0.0, %v1168
        %1170 = vmatmul.bf16.gmra.mxu0 %v1078
        %v1171 = vpop.f32.mrf.mxu0
        %v1172 = vadd.f32 0.0, %v1171
        %v1173 = vpop.f32.mrf.mxu0
        %v1174 = vadd.f32 0.0, %v1173
        %1175 = vmatmul.bf16.gmra.mxu0 %v1079
        %v1176 = vpop.f32.mrf.mxu0
        %v1177 = vadd.f32 0.0, %v1176
        %v1178 = vpop.f32.mrf.mxu0
        %v1179 = vadd.f32 0.0, %v1178
        %1180 = vmatmul.bf16.gmra.mxu0 %v1080
        %v1181 = vpop.f32.mrf.mxu0
        %v1182 = vadd.f32 0.0, %v1181
        %v1183 = vpop.f32.mrf.mxu0
        %v1184 = vadd.f32 0.0, %v1183
        %1185 = vmatmul.bf16.gmra.mxu0 %v1081
        %v1186 = vpop.f32.mrf.mxu0
        %v1187 = vadd.f32 0.0, %v1186
        %v1188 = vpop.f32.mrf.mxu0
        %v1189 = vadd.f32 0.0, %v1188
        %1190 = vmatmul.bf16.gmra.mxu0 %v1082
        %v1191 = vpop.f32.mrf.mxu0
        %v1192 = vadd.f32 0.0, %v1191
        %v1193 = vpop.f32.mrf.mxu0
        %v1194 = vadd.f32 0.0, %v1193
        %1195 = vdwg.mxu0
        %v1196 = vmul.f32 %v1157, %v531
        %v1197 = vmul.f32 %v1159, %v536
        %v1198 = vmul.f32 %v1162, %v541
        %v1199 = vmul.f32 %v1164, %v546
        %v1200 = vmul.f32 %v1167, %v551
        %v1201 = vmul.f32 %v1169, %v556
        %v1202 = vmul.f32 %v1172, %v561
        %v1203 = vmul.f32 %v1174, %v566
        %v1204 = vmul.f32 %v1177, %v571
        %v1205 = vmul.f32 %v1179, %v576
        %v1206 = vmul.f32 %v1182, %v581
        %v1207 = vmul.f32 %v1184, %v586
        %v1208 = vmul.f32 %v1187, %v591
        %v1209 = vmul.f32 %v1189, %v596
        %v1210 = vmul.f32 %v1192, %v601
        %v1211 = vmul.f32 %v1194, %v606
        %v1212 = vpack.c.bf16 %v1197, %v1196
        %v1213 = vpack.c.bf16 %v1199, %v1198
        %v1214 = vpack.c.bf16 %v1201, %v1200
        %v1215 = vpack.c.bf16 %v1203, %v1202
        %v1216 = vpack.c.bf16 %v1205, %v1204
        %v1217 = vpack.c.bf16 %v1207, %v1206
        %v1218 = vpack.c.bf16 %v1209, %v1208
        %v1219 = vpack.c.bf16 %v1211, %v1210
        %1220 = vmatpush.bf16.msra.mxu0 %v1219
        %1221 = vmatpush.bf16.msra.mxu0 %v1218
        %1222 = vmatpush.bf16.msra.mxu0 %v1217
        %1223 = vmatpush.bf16.msra.mxu0 %v1216
        %1224 = vmatpush.bf16.msra.mxu0 %v1215
        %1225 = vmatpush.bf16.msra.mxu0 %v1214
        %1226 = vmatpush.bf16.msra.mxu0 %v1213
        %1227 = vmatpush.bf16.msra.mxu0 %v1212
        %1228 = vmatmul.bf16.gmra.mxu0 %v664
        %v1229 = vpop.f32.mrf.mxu0
        %v1230 = vadd.f32 0.0, %v1229
        %v1231 = vpop.f32.mrf.mxu0
        %v1232 = vadd.f32 0.0, %v1231
        %1233 = vmatmul.bf16.gmra.mxu0 %v665
        %v1234 = vpop.f32.mrf.mxu0
        %v1235 = vadd.f32 0.0, %v1234
        %v1236 = vpop.f32.mrf.mxu0
        %v1237 = vadd.f32 0.0, %v1236
        %1238 = vmatmul.bf16.gmra.mxu0 %v666
        %v1239 = vpop.f32.mrf.mxu0
        %v1240 = vadd.f32 0.0, %v1239
        %v1241 = vpop.f32.mrf.mxu0
        %v1242 = vadd.f32 0.0, %v1241
        %1243 = vmatmul.bf16.gmra.mxu0 %v667
        %v1244 = vpop.f32.mrf.mxu0
        %v1245 = vadd.f32 0.0, %v1244
        %v1246 = vpop.f32.mrf.mxu0
        %v1247 = vadd.f32 0.0, %v1246
        %1248 = vmatmul.bf16.gmra.mxu0 %v668
        %v1249 = vpop.f32.mrf.mxu0
        %v1250 = vadd.f32 0.0, %v1249
        %v1251 = vpop.f32.mrf.mxu0
        %v1252 = vadd.f32 0.0, %v1251
        %1253 = vmatmul.bf16.gmra.mxu0 %v669
        %v1254 = vpop.f32.mrf.mxu0
        %v1255 = vadd.f32 0.0, %v1254
        %v1256 = vpop.f32.mrf.mxu0
        %v1257 = vadd.f32 0.0, %v1256
        %1258 = vmatmul.bf16.gmra.mxu0 %v670
        %v1259 = vpop.f32.mrf.mxu0
        %v1260 = vadd.f32 0.0, %v1259
        %v1261 = vpop.f32.mrf.mxu0
        %v1262 = vadd.f32 0.0, %v1261
        %1263 = vmatmul.bf16.gmra.mxu0 %v671
        %v1264 = vpop.f32.mrf.mxu0
        %v1265 = vadd.f32 0.0, %v1264
        %v1266 = vpop.f32.mrf.mxu0
        %v1267 = vadd.f32 0.0, %v1266
        %1268 = vdwg.mxu0
        %v1269 = vmul.f32 %v1230, %v531
        %v1270 = vmul.f32 %v1232, %v536
        %v1271 = vmul.f32 %v1235, %v541
        %v1272 = vmul.f32 %v1237, %v546
        %v1273 = vmul.f32 %v1240, %v551
        %v1274 = vmul.f32 %v1242, %v556
        %v1275 = vmul.f32 %v1245, %v561
        %v1276 = vmul.f32 %v1247, %v566
        %v1277 = vmul.f32 %v1250, %v571
        %v1278 = vmul.f32 %v1252, %v576
        %v1279 = vmul.f32 %v1255, %v581
        %v1280 = vmul.f32 %v1257, %v586
        %v1281 = vmul.f32 %v1260, %v591
        %v1282 = vmul.f32 %v1262, %v596
        %v1283 = vmul.f32 %v1265, %v601
        %v1284 = vmul.f32 %v1267, %v606
        %v1285 = vld [vmem:[%s8] sm:$0x1]
        %v1287 = vperm.slane %v1285, 0
        %v1289 = vadd.f32 %v1269, %v1287
        %v1290 = vadd.f32 %v1270, %v1287
        %v1291 = vadd.f32 %v1271, %v1287
        %v1292 = vadd.f32 %v1272, %v1287
        %v1293 = vadd.f32 %v1273, %v1287
        %v1294 = vadd.f32 %v1274, %v1287
        %v1295 = vadd.f32 %v1275, %v1287
        %v1296 = vadd.f32 %v1276, %v1287
        %v1297 = vadd.f32 %v1277, %v1287
        %v1298 = vadd.f32 %v1278, %v1287
        %v1299 = vadd.f32 %v1279, %v1287
        %v1300 = vadd.f32 %v1280, %v1287
        %v1301 = vadd.f32 %v1281, %v1287
        %v1302 = vadd.f32 %v1282, %v1287
        %v1303 = vadd.f32 %v1283, %v1287
        %v1304 = vadd.f32 %v1284, %v1287
        %v1305 = vmax.f32 %v1289, 0.0
        %v1306 = vmax.f32 %v1290, 0.0
        %v1307 = vmax.f32 %v1291, 0.0
        %v1308 = vmax.f32 %v1292, 0.0
        %v1309 = vmax.f32 %v1293, 0.0
        %v1310 = vmax.f32 %v1294, 0.0
        %v1311 = vmax.f32 %v1295, 0.0
        %v1312 = vmax.f32 %v1296, 0.0
        %v1313 = vmax.f32 %v1297, 0.0
        %v1314 = vmax.f32 %v1298, 0.0
        %v1315 = vmax.f32 %v1299, 0.0
        %v1316 = vmax.f32 %v1300, 0.0
        %v1317 = vmax.f32 %v1301, 0.0
        %v1318 = vmax.f32 %v1302, 0.0
        %v1319 = vmax.f32 %v1303, 0.0
        %v1320 = vmax.f32 %v1304, 0.0
        %v1321 = vpack.c.bf16 %v1306, %v1305
        %v1322 = vpack.c.bf16 %v1308, %v1307
        %v1323 = vpack.c.bf16 %v1310, %v1309
        %v1324 = vpack.c.bf16 %v1312, %v1311
        %v1325 = vpack.c.bf16 %v1314, %v1313
        %v1326 = vpack.c.bf16 %v1316, %v1315
        %v1327 = vpack.c.bf16 %v1318, %v1317
        %v1328 = vpack.c.bf16 %v1320, %v1319
        %v1329 = vld [vmem:[%s9] sm:$0xf]
        %v1330 = vld [vmem:[%s9 + $0x4] sm:$0xf]
        %v1331 = vld [vmem:[%s9 + $0x8] sm:$0xf]
        %v1332 = vld [vmem:[%s9 + $0xc] sm:$0xf]
        %v1333 = vld [vmem:[%s9 + $0x10] sm:$0xf]
        %v1334 = vld [vmem:[%s9 + $0x14] sm:$0xf]
        %v1335 = vld [vmem:[%s9 + $0x18] sm:$0xf]
        %v1336 = vld [vmem:[%s9 + $0x1c] sm:$0xf]
        %v1337 = vld [vmem:[%s9 + $0x20] sm:$0xf]
        %v1338 = vld [vmem:[%s9 + $0x24] sm:$0xf]
        %v1339 = vld [vmem:[%s9 + $0x28] sm:$0xf]
        %v1340 = vld [vmem:[%s9 + $0x2c] sm:$0xf]
        %v1341 = vld [vmem:[%s9 + $0x30] sm:$0xf]
        %v1342 = vld [vmem:[%s9 + $0x34] sm:$0xf]
        %v1343 = vld [vmem:[%s9 + $0x38] sm:$0xf]
        %v1344 = vld [vmem:[%s9 + $0x3c] sm:$0xf]
        %v1345 = vld [vmem:[%s10] sm:$0x1]
        %v1347 = vperm.slane %v1345, 0
        %v1365 = vunpack.c.l.b16 %v1329
        %v1366 = vunpack.c.l.b16 %v1330
        %v1367 = vunpack.c.l.b16 %v1331
        %v1368 = vunpack.c.l.b16 %v1332
        %v1369 = vunpack.c.l.b16 %v1333
        %v1370 = vunpack.c.l.b16 %v1334
        %v1371 = vunpack.c.l.b16 %v1335
        %v1372 = vunpack.c.l.b16 %v1336
        %v1373 = vunpack.c.l.b16 %v1337
        %v1374 = vunpack.c.l.b16 %v1338
        %v1375 = vunpack.c.l.b16 %v1339
        %v1376 = vunpack.c.l.b16 %v1340
        %v1377 = vunpack.c.l.b16 %v1341
        %v1378 = vunpack.c.l.b16 %v1342
        %v1379 = vunpack.c.l.b16 %v1343
        %v1380 = vunpack.c.l.b16 %v1344
        %v1381 = vpack.c.b16 %v1366, %v1365
        %v1382 = vpack.c.b16 %v1368, %v1367
        %v1383 = vpack.c.b16 %v1370, %v1369
        %v1384 = vpack.c.b16 %v1372, %v1371
        %v1385 = vpack.c.b16 %v1374, %v1373
        %v1386 = vpack.c.b16 %v1376, %v1375
        %v1387 = vpack.c.b16 %v1378, %v1377
        %v1388 = vpack.c.b16 %v1380, %v1379
        %1397 = vmatpush.bf16.msra.mxu0 %v1388
        %1398 = vmatpush.bf16.msra.mxu0 %v1387
        %1399 = vmatpush.bf16.msra.mxu0 %v1386
        %1400 = vmatpush.bf16.msra.mxu0 %v1385
        %1401 = vmatpush.bf16.msra.mxu0 %v1384
        %1402 = vmatpush.bf16.msra.mxu0 %v1383
        %1403 = vmatpush.bf16.msra.mxu0 %v1382
        %1404 = vmatpush.bf16.msra.mxu0 %v1381
        %1405 = vmatmul.bf16.gmra.mxu0 %v1321
        %v1406 = vpop.f32.mrf.mxu0
        %v1407 = vadd.f32 %v1347, %v1406
        %v1408 = vpop.f32.mrf.mxu0
        %v1409 = vadd.f32 %v1347, %v1408
        %1410 = vmatmul.bf16.gmra.mxu0 %v1322
        %v1411 = vpop.f32.mrf.mxu0
        %v1412 = vadd.f32 %v1347, %v1411
        %v1413 = vpop.f32.mrf.mxu0
        %v1414 = vadd.f32 %v1347, %v1413
        %1415 = vmatmul.bf16.gmra.mxu0 %v1323
        %v1416 = vpop.f32.mrf.mxu0
        %v1417 = vadd.f32 %v1347, %v1416
        %v1418 = vpop.f32.mrf.mxu0
        %v1419 = vadd.f32 %v1347, %v1418
        %1420 = vmatmul.bf16.gmra.mxu0 %v1324
        %v1421 = vpop.f32.mrf.mxu0
        %v1422 = vadd.f32 %v1347, %v1421
        %v1423 = vpop.f32.mrf.mxu0
        %v1424 = vadd.f32 %v1347, %v1423
        %1425 = vmatmul.bf16.gmra.mxu0 %v1325
        %v1426 = vpop.f32.mrf.mxu0
        %v1427 = vadd.f32 %v1347, %v1426
        %v1428 = vpop.f32.mrf.mxu0
        %v1429 = vadd.f32 %v1347, %v1428
        %1430 = vmatmul.bf16.gmra.mxu0 %v1326
        %v1431 = vpop.f32.mrf.mxu0
        %v1432 = vadd.f32 %v1347, %v1431
        %v1433 = vpop.f32.mrf.mxu0
        %v1434 = vadd.f32 %v1347, %v1433
        %1435 = vmatmul.bf16.gmra.mxu0 %v1327
        %v1436 = vpop.f32.mrf.mxu0
        %v1437 = vadd.f32 %v1347, %v1436
        %v1438 = vpop.f32.mrf.mxu0
        %v1439 = vadd.f32 %v1347, %v1438
        %1440 = vmatmul.bf16.gmra.mxu0 %v1328
        %v1441 = vpop.f32.mrf.mxu0
        %v1442 = vadd.f32 %v1347, %v1441
        %v1443 = vpop.f32.mrf.mxu0
        %v1444 = vadd.f32 %v1347, %v1443
        %1445 = vdwg.mxu0
        %v1446 = vmax.f32 %v1407, 0.0
        %v1447 = vmax.f32 %v1409, 0.0
        %v1448 = vmax.f32 %v1412, 0.0
        %v1449 = vmax.f32 %v1414, 0.0
        %v1450 = vmax.f32 %v1417, 0.0
        %v1451 = vmax.f32 %v1419, 0.0
        %v1452 = vmax.f32 %v1422, 0.0
        %v1453 = vmax.f32 %v1424, 0.0
        %v1454 = vmax.f32 %v1427, 0.0
        %v1455 = vmax.f32 %v1429, 0.0
        %v1456 = vmax.f32 %v1432, 0.0
        %v1457 = vmax.f32 %v1434, 0.0
        %v1458 = vmax.f32 %v1437, 0.0
        %v1459 = vmax.f32 %v1439, 0.0
        %v1460 = vmax.f32 %v1442, 0.0
        %v1461 = vmax.f32 %v1444, 0.0
        %v1462 = vpack.c.bf16 %v1447, %v1446
        %v1463 = vpack.c.bf16 %v1449, %v1448
        %v1464 = vpack.c.bf16 %v1451, %v1450
        %v1465 = vpack.c.bf16 %v1453, %v1452
        %v1466 = vpack.c.bf16 %v1455, %v1454
        %v1467 = vpack.c.bf16 %v1457, %v1456
        %v1468 = vpack.c.bf16 %v1459, %v1458
        %v1469 = vpack.c.bf16 %v1461, %v1460
        %v1470 = vld [vmem:[%s11] sm:$0xf]
        %v1471 = vld [vmem:[%s11 + $0x4] sm:$0xf]
        %v1472 = vld [vmem:[%s11 + $0x8] sm:$0xf]
        %v1473 = vld [vmem:[%s11 + $0xc] sm:$0xf]
        %v1474 = vld [vmem:[%s11 + $0x10] sm:$0xf]
        %v1475 = vld [vmem:[%s11 + $0x14] sm:$0xf]
        %v1476 = vld [vmem:[%s11 + $0x18] sm:$0xf]
        %v1477 = vld [vmem:[%s11 + $0x1c] sm:$0xf]
        %v1478 = vld [vmem:[%s12] sm:$0x1]
        %v1480 = vperm.slane %v1478, 0
        %v1490 = vunpack.c.l.b16 %v1470
        %v1491 = vunpack.c.l.b16 %v1471
        %v1492 = vunpack.c.l.b16 %v1472
        %v1493 = vunpack.c.l.b16 %v1473
        %v1494 = vunpack.c.l.b16 %v1474
        %v1495 = vunpack.c.l.b16 %v1475
        %v1496 = vunpack.c.l.b16 %v1476
        %v1497 = vunpack.c.l.b16 %v1477
        %v1498 = vpack.c.b16 %v1491, %v1490
        %v1499 = vpack.c.b16 %v1493, %v1492
        %v1500 = vpack.c.b16 %v1495, %v1494
        %v1501 = vpack.c.b16 %v1497, %v1496
        %v1507 = vsel %vm985, %v1462, 0
        %v1510 = vsel %vm985, %v1463, 0
        %v1513 = vsel %vm985, %v1464, 0
        %v1516 = vsel %vm985, %v1465, 0
        %v1519 = vsel %vm985, %v1466, 0
        %v1522 = vsel %vm985, %v1467, 0
        %v1525 = vsel %vm985, %v1468, 0
        %v1528 = vsel %vm985, %v1469, 0
        %1530 = vmatpush.bf16.msra.mxu0 0
        %1531 = vmatpush.bf16.msra.mxu0 0
        %1532 = vmatpush.bf16.msra.mxu0 0
        %1533 = vmatpush.bf16.msra.mxu0 0
        %1534 = vmatpush.bf16.msra.mxu0 %v1501
        %1535 = vmatpush.bf16.msra.mxu0 %v1500
        %1536 = vmatpush.bf16.msra.mxu0 %v1499
        %1537 = vmatpush.bf16.msra.mxu0 %v1498
        %1538 = vmatmul.bf16.gmra.mxu0 %v1507
        %v1539 = vpop.f32.mrf.mxu0
        %v1540 = vadd.f32 %v1480, %v1539
        %v1541 = vpop.f32.mrf.mxu0
        %v1542 = vadd.f32 %v1480, %v1541
        %1543 = vmatmul.bf16.gmra.mxu0 %v1510
        %v1544 = vpop.f32.mrf.mxu0
        %v1545 = vadd.f32 %v1480, %v1544
        %v1546 = vpop.f32.mrf.mxu0
        %v1547 = vadd.f32 %v1480, %v1546
        %1548 = vmatmul.bf16.gmra.mxu0 %v1513
        %v1549 = vpop.f32.mrf.mxu0
        %v1550 = vadd.f32 %v1480, %v1549
        %v1551 = vpop.f32.mrf.mxu0
        %v1552 = vadd.f32 %v1480, %v1551
        %1553 = vmatmul.bf16.gmra.mxu0 %v1516
        %v1554 = vpop.f32.mrf.mxu0
        %v1555 = vadd.f32 %v1480, %v1554
        %v1556 = vpop.f32.mrf.mxu0
        %v1557 = vadd.f32 %v1480, %v1556
        %1558 = vmatmul.bf16.gmra.mxu0 %v1519
        %v1559 = vpop.f32.mrf.mxu0
        %v1560 = vadd.f32 %v1480, %v1559
        %v1561 = vpop.f32.mrf.mxu0
        %v1562 = vadd.f32 %v1480, %v1561
        %1563 = vmatmul.bf16.gmra.mxu0 %v1522
        %v1564 = vpop.f32.mrf.mxu0
        %v1565 = vadd.f32 %v1480, %v1564
        %v1566 = vpop.f32.mrf.mxu0
        %v1567 = vadd.f32 %v1480, %v1566
        %1568 = vmatmul.bf16.gmra.mxu0 %v1525
        %v1569 = vpop.f32.mrf.mxu0
        %v1570 = vadd.f32 %v1480, %v1569
        %v1571 = vpop.f32.mrf.mxu0
        %v1572 = vadd.f32 %v1480, %v1571
        %1573 = vmatmul.bf16.gmra.mxu0 %v1528
        %v1574 = vpop.f32.mrf.mxu0
        %v1575 = vadd.f32 %v1480, %v1574
        %v1576 = vpop.f32.mrf.mxu0
        %v1577 = vadd.f32 %v1480, %v1576
        %1578 = vdwg.mxu0
        %1579 = vst [vmem:[%s463] sm:$0xff] %v1540
        %1580 = vst [vmem:[%s463 + $0x8] sm:$0xff] %v1542
        %1581 = vst [vmem:[%s463 + $0x10] sm:$0xff] %v1545
        %1582 = vst [vmem:[%s463 + $0x18] sm:$0xff] %v1547
        %1583 = vst [vmem:[%s463 + $0x20] sm:$0xff] %v1550
        %1584 = vst [vmem:[%s463 + $0x28] sm:$0xff] %v1552
        %1585 = vst [vmem:[%s463 + $0x30] sm:$0xff] %v1555
        %1586 = vst [vmem:[%s463 + $0x38] sm:$0xff] %v1557
        %1587 = vst [vmem:[%s463 + $0x40] sm:$0xff] %v1560
        %1588 = vst [vmem:[%s463 + $0x48] sm:$0xff] %v1562
        %1589 = vst [vmem:[%s463 + $0x50] sm:$0xff] %v1565
        %1590 = vst [vmem:[%s463 + $0x58] sm:$0xff] %v1567
        %1591 = vst [vmem:[%s463 + $0x60] sm:$0xff] %v1570
        %1592 = vst [vmem:[%s463 + $0x68] sm:$0xff] %v1572
        %1593 = vst [vmem:[%s463 + $0x70] sm:$0xff] %v1575
        %1594 = vst [vmem:[%s463 + $0x78] sm:$0xff] %v1577
        %s1595 = sand.u32 %s323, 1
        %s1596 = scalar_lea.sflag [#allocation3], %s1595
        %s1597 = sand.u32 %s323, 1
        %s1598 = smul.addr %s1597, 128
        %s1599 = scalar_lea.vmem [#allocation2], %s1598
        // Predicated region
        $region73: #{tpu_custom_call.1} parent=71 // pred_check
          %p1600 = pneg %p333
        $region74: #{tpu_custom_call.1} parent=71 // pred_check_branch
          %1602 = sbr.rel (%p1600) target = $region76
        $region75: #{tpu_custom_call.1} parent=71 // pred_region
          %1604 = vsyncadd %s1596, 0
          %s1605 = smul.addr %s27, 16
          %s1606 = smul.addr %s1605, 8
          %s1607 = scalar_lea.hbm %s13, %s1606
          %s1608 = sshll.u32 %s1599, 4
          %s1609 = int_to_ptr.vmem [resolvable:$true] %s1608
          %s1610 = sshll.u32 %s1607, 4
          %s1611 = int_to_ptr.hbm [resolvable:$true] %s1610
          %1616 = dma.vmem_to_hbm [thread:$0]  %s1609, 2048, %s1611, %s1596, 128, 128, 8
        $region76: #{tpu_custom_call.1} parent=71 // pred_fallthru
          _
      $region72: #{tpu_custom_call.1} parent=5 // pred_fallthru
        _
      %p1617 = scmp.le.s32.totalorder 2, %s22
      // Predicated region
      $region77: #{tpu_custom_call.1} parent=5 // pred_check
        %p1618 = pneg %p1617
      $region78: #{tpu_custom_call.1} parent=5 // pred_check_branch
        %1620 = sbr.rel (%p1618) target = $region80
      $region79: #{tpu_custom_call.1} parent=5 // pred_region
        %s1621 = ssub.s32 %s22, 2
        // Predicated region
        $region81: #{tpu_custom_call.1} parent=79 // pred_check
          %p1622 = pneg %p339
        $region82: #{tpu_custom_call.1} parent=79 // pred_check_branch
          %1624 = sbr.rel (%p1622) target = $region84
        $region83: #{tpu_custom_call.1} parent=79 // pred_region
          %s1625 = sand.u32 %s324, 1
          %s1626 = scalar_lea.sflag [#allocation3], %s1625
          %s1627 = sand.u32 %s324, 1
          %s1628 = smul.addr %s1627, 128
          %s1629 = scalar_lea.vmem [#allocation2], %s1628
          %1631 = dma.done %s1626, 2048
        $region84: #{tpu_custom_call.1} parent=79 // pred_fallthru
          _
      $region80: #{tpu_custom_call.1} parent=5 // pred_fallthru
        _
    $region6: #{tpu_custom_call.1} parent=1 // loop_footer
      %s26 = sadd.s32 1, %s22
    $region7: #{tpu_custom_call.1} parent=1 // loop_footer_branch
      %21 = sbr.rel target = $region3
    $region8: #{tpu_custom_call.1} parent=1 // loop_exit
      _
    %1632 = vsyncpa [#allocation3], 1
    %s1633 = scalar_lea.sflag [#allocation3], 1
    %1634 = vsyncpa %s1633, 1

</llo_original>
